<compile_context>
chip_gen: v7x
topology: tpu7x:2x2x1
jax: 0.10.0
libtpu: 0.0.40
codegen_flags: <defaults>
</compile_context>

<pallas_src>
import functools

import jax
import jax.numpy as jnp
from jax.experimental import pallas as pl
from jax.experimental.pallas import tpu as pltpu

_MIB = 1024 * 1024


def _round_up(x, m):
    return ((x + m - 1) // m) * m


@functools.lru_cache(maxsize=None)
def _vmem_limit_bytes():
    """Per-generation scoped-VMEM limit with headroom.

    v7x has only 64 MiB physical VMEM per TensorCore, so requesting all of it
    leaves no room for Mosaic internal scratch / pipeline buffers; v5e / v6e
    have 128 MiB, so the limit can be raised well past the default.
    """
    try:
        cap = int(pltpu.get_tpu_info().vmem_capacity_bytes)
    except Exception:
        return 64 * _MIB                      # conservative, works everywhere
    if cap <= 64 * _MIB:                      # v7x-class part
        return min(48 * _MIB, (cap * 3) // 4)
    return 100 * _MIB                         # v5e / v6e (128 MiB physical)


@functools.lru_cache(maxsize=None)
def _single_buffer_mode():
    """Return pl.Buffered(1) if this JAX/Mosaic supports it, else None.

    Used to single-buffer the constant-index-map expert weight stacks in the
    small-S path: they are never re-fetched, so default double buffering only
    doubles their VMEM footprint.  Probed with a tiny multi-step kernel so an
    unsupported API degrades gracefully instead of breaking the forward pass.
    """
    try:
        mode = pl.Buffered(1)

        def _copy(x_ref, o_ref):
            o_ref[...] = x_ref[...]

        x = jnp.arange(8 * 128, dtype=jnp.float32).reshape(8, 128)
        out = pl.pallas_call(
            _copy,
            out_shape=jax.ShapeDtypeStruct((16, 128), jnp.float32),
            grid=(2,),
            in_specs=[pl.BlockSpec((8, 128), lambda i: (0, 0),
                                   pipeline_mode=mode)],
            out_specs=pl.BlockSpec((8, 128), lambda i: (i, 0)),
        )(x)
        jax.block_until_ready(out)
        if not bool(jnp.all(out == jnp.concatenate([x, x], axis=0))):
            return None
        return mode
    except Exception:
        return None


# --------------------------------------------------------------------------
# Kernels
# --------------------------------------------------------------------------
def _merge_adapter_outmix_kernel(prob_ref, x_ref, wdT_ref, bd_ref, wuT_ref,
                                 bu_ref, o_ref):
    """Small-S path: one batched-M matmul per expert, mix the outputs.

    prob_ref : VMEM (nb, 1, K) f32   per-instance expert mixture weights
    x_ref    : VMEM (nb, S, H)       hidden states for nb batch instances
    wdT_ref  : VMEM (K, H, Db) bf16  expert down-proj weights (pre-transposed)
    bd_ref   : VMEM (K, 1, Db) f32
    wuT_ref  : VMEM (K, Db, H) bf16
    bu_ref   : VMEM (K, 1, H)  f32
    o_ref    : VMEM (nb, S, H)
    """
    nb, S, H = x_ref.shape
    K = wdT_ref.shape[0]
    Db = wdT_ref.shape[2]
    rows = nb * S

    x = x_ref[...]                                   # (nb, S, H)
    x2 = x.astype(jnp.bfloat16).reshape(rows, H)     # fold batch into MXU M dim
    prob = prob_ref[...]                             # (nb, 1, K) f32

    # ---- down proj: h = sum_k p_k * (x @ WdT_k) + sum_k p_k * bd_k ; ReLU ----
    h = jnp.zeros((nb, S, Db), jnp.float32)
    bd_mix = jnp.zeros((nb, 1, Db), jnp.float32)
    for k in range(K):
        pk = prob[:, :, k][:, :, None]               # (nb, 1, 1)
        dk = jnp.dot(x2, wdT_ref[k], preferred_element_type=jnp.float32)
        h = h + pk * dk.reshape(nb, S, Db)
        bd_mix = bd_mix + pk * bd_ref[k]
    h = jnp.maximum(h + bd_mix, 0.0)

    # ---- up proj: fold p_k into the small (nb, S, Db) operand (less VPU) ----
    r = jnp.zeros((rows, H), jnp.float32)
    bu_mix = jnp.zeros((nb, 1, H), jnp.float32)
    for k in range(K):
        pk = prob[:, :, k][:, :, None]
        hk = (pk * h).astype(jnp.bfloat16).reshape(rows, Db)
        r = r + jnp.dot(hk, wuT_ref[k], preferred_element_type=jnp.float32)
        bu_mix = bu_mix + pk * bu_ref[k]

    out = r.reshape(nb, S, H) + bu_mix + x.astype(jnp.float32)
    o_ref[...] = out.astype(o_ref.dtype)


def _merge_adapter_wmix_kernel(x_ref, wd_ref, bd_ref, wu_ref, bu_ref, o_ref):
    """Large-S path: two bf16 MXU matmuls against pre-mixed per-instance weights.

    x_ref  : VMEM (ts, H)        one S tile of hidden states (batch squeezed)
    wd_ref : VMEM (H, Db)  bf16  per-instance mixed down weights
    bd_ref : VMEM (1, Db)  f32
    wu_ref : VMEM (Db, H)  bf16
    bu_ref : VMEM (1, H)   f32
    o_ref  : VMEM (ts, H)
    """
    x = x_ref[...]
    h = jnp.dot(x.astype(jnp.bfloat16), wd_ref[...],
                preferred_element_type=jnp.float32)
    h = jnp.maximum(h + bd_ref[...], 0.0).astype(jnp.bfloat16)
    r = jnp.dot(h, wu_ref[...], preferred_element_type=jnp.float32)
    o_ref[...] = (r + bu_ref[...] + x.astype(jnp.float32)).astype(o_ref.dtype)


# --------------------------------------------------------------------------
# Parameter preparation + forward wrapper
# --------------------------------------------------------------------------
def prepare_merge_adapter_params(w_down, b_down, w_up, b_up,
                                 compute_dtype=jnp.bfloat16, lane_multiple=128):
    """One-time (parameter-load-time) preparation.

    * pre-transposes the expert weight stacks for plain row-major dots,
    * zero-pads the bottleneck dim Db to a lane multiple (exact: padded
      channels get zero weight, zero bias and zero up-proj rows),
    * keeps f32 master copies (mix in f32; only MXU operands are bf16) plus
      bf16 stacks for the small-S output-mix path.
    """
    K, Db, H = w_down.shape
    wdT = jnp.transpose(w_down, (0, 2, 1)).astype(jnp.float32)   # [K, H, Db]
    wuT = jnp.transpose(w_up, (0, 2, 1)).astype(jnp.float32)     # [K, Db, H]
    bd = b_down.astype(jnp.float32)                              # [K, Db]
    bu = b_up.astype(jnp.float32)                                # [K, H]

    db_pad = _round_up(Db, lane_multiple)
    if db_pad != Db:
        wdT = jnp.pad(wdT, ((0, 0), (0, 0), (0, db_pad - Db)))
        wuT = jnp.pad(wuT, ((0, 0), (0, db_pad - Db), (0, 0)))
        bd = jnp.pad(bd, ((0, 0), (0, db_pad - Db)))

    return {
        "wdT_f32": wdT, "wuT_f32": wuT, "bd": bd, "bu": bu,
        "wdT_bf16": wdT.astype(compute_dtype),
        "wuT_bf16": wuT.astype(compute_dtype),
    }


def merge_adapter_forward(hidden_states, prob, params, *,
                          s_tile=512, small_s_threshold=128):
    """hidden_states: [N, S, H] (f32 or bf16), prob: [N, K]; params from
    `prepare_merge_adapter_params`.  Returns x + adapter(x, prob), [N, S, H],
    in hidden_states' dtype.
    """
    N, S, H = hidden_states.shape
    K = prob.shape[1]
    Db = params["wdT_f32"].shape[2]            # lane-padded bottleneck dim
    prob = prob.astype(jnp.float32)
    out_dtype = hidden_states.dtype
    vmem_limit = _vmem_limit_bytes()
    x_bytes = hidden_states.size * hidden_states.dtype.itemsize

    if S <= small_s_threshold:
        # ---------------- small-S path: batched-M output mix -----------------
        cap = max(1, 256 // max(S, 1))             # ~256 M rows per grid step
        if N > 1:
            cap = min(cap, max(1, (N + 1) // 2))   # keep >=2 steps for dual-TC
        nb = 1
        for d in range(min(N, cap), 0, -1):
            if N % d == 0:
                nb = d
                break
        grid = (N // nb,)

        prob3 = prob.reshape(N, 1, K)
        wdT, wuT = params["wdT_bf16"], params["wuT_bf16"]
        bd3 = params["bd"].reshape(K, 1, Db)
        bu3 = params["bu"].reshape(K, 1, H)

        sb_mode = _single_buffer_mode()

        def resident(shape):
            imap = lambda *_: (0,) * len(shape)
            if sb_mode is None:
                return pl.BlockSpec(shape, imap)
            return pl.BlockSpec(shape, imap, pipeline_mode=sb_mode)

        bytes_accessed = int(2 * x_bytes + sum(
            a.size * a.dtype.itemsize for a in (wdT, wuT, bd3, bu3, prob3)))
        cost = pl.CostEstimate(flops=4 * N * S * H * Db * K,
                               transcendentals=0,
                               bytes_accessed=bytes_accessed)

        return pl.pallas_call(
            _merge_adapter_outmix_kernel,
            out_shape=jax.ShapeDtypeStruct((N, S, H), out_dtype),
            grid=grid,
            in_specs=[
                pl.BlockSpec((nb, 1, K), lambda i: (i, 0, 0)),
                pl.BlockSpec((nb, S, H), lambda i: (i, 0, 0)),
                resident((K, H, Db)),
                resident((K, 1, Db)),
                resident((K, Db, H)),
                resident((K, 1, H)),
            ],
            out_specs=pl.BlockSpec((nb, S, H), lambda i: (i, 0, 0)),
            compiler_params=pltpu.CompilerParams(
                dimension_semantics=("parallel",),
                vmem_limit_bytes=vmem_limit),
            cost_estimate=cost,
        )(prob3, hidden_states, wdT, bd3, wuT, bu3)

    # ------------- large-S path: streamed per-instance mixed weights ---------
    # Weight mix hoisted out of the kernel: f32 mix by XLA, mixed weights cast
    # to bf16 and streamed with index_map (n, 0, 0).  No scratch is carried
    # across S tiles, so both grid axes are parallel.
    wd_mix = jnp.einsum("nk,khd->nhd", prob, params["wdT_f32"]).astype(jnp.bfloat16)
    wu_mix = jnp.einsum("nk,kdh->ndh", prob, params["wuT_f32"]).astype(jnp.bfloat16)
    bd_mix = jnp.einsum("nk,kd->nd", prob, params["bd"]).reshape(N, 1, Db)
    bu_mix = jnp.einsum("nk,kh->nh", prob, params["bu"]).reshape(N, 1, H)

    ts = min(s_tile, S)
    grid = (N, pl.cdiv(S, ts))

    bytes_accessed = int(2 * x_bytes + sum(
        a.size * a.dtype.itemsize for a in (wd_mix, wu_mix, bd_mix, bu_mix)))
    cost = pl.CostEstimate(flops=4 * N * S * H * Db,
                           transcendentals=0,
                           bytes_accessed=bytes_accessed)

    return pl.pallas_call(
        _merge_adapter_wmix_kernel,
        out_shape=jax.ShapeDtypeStruct((N, S, H), out_dtype),
        grid=grid,
        in_specs=[
            pl.BlockSpec((None, ts, H), lambda n, s: (n, s, 0)),
            pl.BlockSpec((None, H, Db), lambda n, s: (n, 0, 0)),
            pl.BlockSpec((None, 1, Db), lambda n, s: (n, 0, 0)),
            pl.BlockSpec((None, Db, H), lambda n, s: (n, 0, 0)),
            pl.BlockSpec((None, 1, H), lambda n, s: (n, 0, 0)),
        ],
        out_specs=pl.BlockSpec((None, ts, H), lambda n, s: (n, s, 0)),
        compiler_params=pltpu.CompilerParams(
            dimension_semantics=("parallel", "parallel"),
            vmem_limit_bytes=vmem_limit),
        cost_estimate=cost,
    )(hidden_states, wd_mix, bd_mix, wu_mix, bu_mix)


# --------------------------------------------------------------------------
# Pure-JAX reference mirroring the PyTorch MergeAdapter.forward (eval mode)
# --------------------------------------------------------------------------
def reference_forward(hidden_states, prob, w_down, b_down, w_up, b_up):
    wd = jnp.einsum("nk,koi->noi", prob, w_down)    # [N, Db, H]
    bd = jnp.einsum("nk,ko->no", prob, b_down)      # [N, Db]
    wu = jnp.einsum("nk,koi->noi", prob, w_up)      # [N, H, Db]
    bu = jnp.einsum("nk,ko->no", prob, b_up)        # [N, H]

    r = jnp.einsum("nsh,noh->nso", hidden_states, wd) + bd[:, None, :]
    r = jnp.maximum(r, 0.0)
    r = jnp.einsum("nso,nho->nsh", r, wu) + bu[:, None, :]
    return hidden_states + r


if __name__ == "__main__":
    key = jax.random.PRNGKey(0)

    def make_inputs(k, N, S, H, ds_factor, K):
        Db = H // ds_factor
        k1, k2, k3, k4, k5, k6 = jax.random.split(k, 6)
        std = 0.001
        w_down = jnp.clip(std * jax.random.normal(k1, (K, Db, H), jnp.float32),
                          -2 * std, 2 * std)
        b_down = jnp.clip(std * jax.random.normal(k2, (K, Db), jnp.float32),
                          -2 * std, 2 * std)
        w_up = jnp.clip(std * jax.random.normal(k3, (K, H, Db), jnp.float32),
                        -2 * std, 2 * std)
        b_up = jnp.clip(std * jax.random.normal(k4, (K, H), jnp.float32),
                        -2 * std, 2 * std)
        x = jax.random.normal(k5, (N, S, H), jnp.float32)
        prob = jax.nn.softmax(jax.random.normal(k6, (N, K), jnp.float32), axis=-1)
        return x, prob, w_down, b_down, w_up, b_up

    k_small, k_large = jax.random.split(key)

    # --- test 1: small module-scale shapes -> batched-M output-mix path ---
    x, prob, w_down, b_down, w_up, b_up = make_inputs(
        k_small, N=2, S=8, H=32, ds_factor=4, K=3)
    params = prepare_merge_adapter_params(w_down, b_down, w_up, b_up)
    out = jax.block_until_ready(merge_adapter_forward(x, prob, params))
    ref = reference_forward(x, prob, w_down, b_down, w_up, b_up)
    assert out.shape == ref.shape
    assert jnp.allclose(out, ref, atol=1e-3, rtol=1e-3), (
        f"small-S max abs err {jnp.max(jnp.abs(out - ref))}")

    # --- test 2: longer sequence -> streamed mixed-weight + S-tiling path ---
    x, prob, w_down, b_down, w_up, b_up = make_inputs(
        k_large, N=2, S=512, H=256, ds_factor=4, K=3)
    params = prepare_merge_adapter_params(w_down, b_down, w_up, b_up)
    out = jax.block_until_ready(merge_adapter_forward(x, prob, params))
    ref = reference_forward(x, prob, w_down, b_down, w_up, b_up)
    assert jnp.allclose(out, ref, atol=1e-3, rtol=1e-3), (
        f"large-S max abs err {jnp.max(jnp.abs(out - ref))}")

    # --- test 3: bf16 hidden_states / bf16 output (memory-bound path) ---
    x_bf = x.astype(jnp.bfloat16)
    out_bf = jax.block_until_ready(merge_adapter_forward(x_bf, prob, params))
    assert out_bf.dtype == jnp.bfloat16
    ref_bf = reference_forward(x_bf.astype(jnp.float32), prob,
                               w_down, b_down, w_up, b_up)
    assert jnp.allclose(out_bf.astype(jnp.float32), ref_bf,
                        atol=5e-2, rtol=5e-2), (
        f"bf16 max abs err {jnp.max(jnp.abs(out_bf.astype(jnp.float32) - ref_bf))}")

    print("KERNEL_OK")
</pallas_src>

<mosaic_0001>
module attributes {stable_mosaic.version = 11 : i64} {
  func.func @_copy(%arg0: i32, %arg1: memref<8x128xf32, #tpu.memory_space<vmem>>, %arg2: memref<8x128xf32, #tpu.memory_space<vmem>>) attributes {dimension_semantics = [#tpu.dimension_semantics<arbitrary>], iteration_bounds = array<i64: 2>, scalar_prefetch = 0 : i64, scratch_operands = 0 : i64, tpu.core_type = #tpu.core_type<tc>, window_params = [{pipeline_mode = #tpu.pipeline_mode<synchronous>, transform_indices = @transform_0, window_bounds = array<i64: 8, 128>}, {transform_indices = @transform_1, window_bounds = array<i64: 8, 128>}]} {
    %c0 = arith.constant 0 : index
    %c0_0 = arith.constant 0 : index
    %0 = vector.load %arg1[%c0, %c0_0] : memref<8x128xf32, #tpu.memory_space<vmem>>, vector<8x128xf32>
    %c0_1 = arith.constant 0 : index
    %c0_2 = arith.constant 0 : index
    %1 = vector.load %arg2[%c0_1, %c0_2] : memref<8x128xf32, #tpu.memory_space<vmem>>, vector<8x128xf32>
    tpu.vector_store %arg2[%c0_1, %c0_2], %0 {strides = array<i32>} : memref<8x128xf32, #tpu.memory_space<vmem>>, vector<8x128xf32>,
    return
  }
  func.func @transform_0(%arg0: i32) -> (i32, i32) {
    %c0_i32 = arith.constant 0 : i32
    %c0_i32_0 = arith.constant 0 : i32
    %c0_i32_1 = arith.constant 0 : i32
    return %c0_i32, %c0_i32_0 : i32, i32
  }
  func.func @transform_1(%arg0: i32) -> (i32, i32) {
    %c0_i32 = arith.constant 0 : i32
    %c0_i32_0 = arith.constant 0 : i32
    return %arg0, %c0_i32 : i32, i32
  }
}

module attributes {stable_mosaic.version = 11 : i64} {
  func.func @_merge_adapter_outmix_kernel(%arg0: i32, %arg1: memref<1x1x3xf32, #tpu.memory_space<vmem>>, %arg2: memref<1x8x32xf32, #tpu.memory_space<vmem>>, %arg3: memref<3x32x128xbf16, #tpu.memory_space<vmem>>, %arg4: memref<3x1x128xf32, #tpu.memory_space<vmem>>, %arg5: memref<3x128x32xbf16, #tpu.memory_space<vmem>>, %arg6: memref<3x1x32xf32, #tpu.memory_space<vmem>>, %arg7: memref<1x8x32xf32, #tpu.memory_space<vmem>>) attributes {dimension_semantics = [#tpu.dimension_semantics<parallel>], iteration_bounds = array<i64: 2>, scalar_prefetch = 0 : i64, scratch_operands = 0 : i64, tpu.core_type = #tpu.core_type<tc>, window_params = [{transform_indices = @transform_0, window_bounds = array<i64: 1, 1, 3>}, {transform_indices = @transform_1, window_bounds = array<i64: 1, 8, 32>}, {pipeline_mode = #tpu.pipeline_mode<synchronous>, transform_indices = @transform_2, window_bounds = array<i64: 3, 32, 128>}, {pipeline_mode = #tpu.pipeline_mode<synchronous>, transform_indices = @transform_3, window_bounds = array<i64: 3, 1, 128>}, {pipeline_mode = #tpu.pipeline_mode<synchronous>, transform_indices = @transform_4, window_bounds = array<i64: 3, 128, 32>}, {pipeline_mode = #tpu.pipeline_mode<synchronous>, transform_indices = @transform_5, window_bounds = array<i64: 3, 1, 32>}, {transform_indices = @transform_6, window_bounds = array<i64: 1, 8, 32>}]} {
    %c0 = arith.constant 0 : index
    %c0_0 = arith.constant 0 : index
    %c0_1 = arith.constant 0 : index
    %0 = vector.load %arg2[%c0, %c0_0, %c0_1] : memref<1x8x32xf32, #tpu.memory_space<vmem>>, vector<1x8x32xf32>
    %1 = arith.truncf %0 : vector<1x8x32xf32> to vector<1x8x32xbf16>
    %2 = vector.shape_cast %1 : vector<1x8x32xbf16> to vector<8x32xbf16>
    %c0_2 = arith.constant 0 : index
    %c0_3 = arith.constant 0 : index
    %c0_4 = arith.constant 0 : index
    %3 = vector.load %arg1[%c0_2, %c0_3, %c0_4] : memref<1x1x3xf32, #tpu.memory_space<vmem>>, vector<1x1x3xf32>
    %cst = arith.constant 0.000000e+00 : f32
    %4 = vector.broadcast %cst : f32 to vector<1x8x128xf32>
    %cst_5 = arith.constant 0.000000e+00 : f32
    %5 = vector.broadcast %cst_5 : f32 to vector<1x1x128xf32>
    %6 = vector.extract_strided_slice %3 {offsets = [0, 0, 0], sizes = [1, 1, 1], strides = [1, 1, 1]} : vector<1x1x3xf32> to vector<1x1x1xf32>
    %7 = vector.shape_cast %6 : vector<1x1x1xf32> to vector<1x1xf32>
    %8 = vector.shape_cast %7 : vector<1x1xf32> to vector<1x1x1xf32>
    %c0_6 = arith.constant 0 : index
    %c0_7 = arith.constant 0 : index
    %c0_8 = arith.constant 0 : index
    %9 = vector.load %arg3[%c0_6, %c0_7, %c0_8] : memref<3x32x128xbf16, #tpu.memory_space<vmem>>, vector<1x32x128xbf16>
    %10 = vector.shape_cast %9 : vector<1x32x128xbf16> to vector<32x128xbf16>
    %cst_9 = arith.constant dense<0.000000e+00> : vector<8x128xf32>
    %11 = tpu.matmul %2, %10, %cst_9 {dimension_numbers = #tpu.dot_dimension_numbers<[1], [0], [0], [1], [0, 0, 1, 1], [], []>} : vector<8x32xbf16>, vector<32x128xbf16>, vector<8x128xf32> -> vector<8x128xf32>
    %12 = vector.shape_cast %11 : vector<8x128xf32> to vector<1x8x128xf32>
    %13 = vector.broadcast %8 : vector<1x1x1xf32> to vector<1x8x128xf32>
    %14 = arith.mulf %13, %12 : vector<1x8x128xf32>
    %15 = arith.addf %4, %14 : vector<1x8x128xf32>
    %c0_10 = arith.constant 0 : index
    %c0_11 = arith.constant 0 : index
    %c0_12 = arith.constant 0 : index
    %16 = vector.load %arg4[%c0_10, %c0_11, %c0_12] : memref<3x1x128xf32, #tpu.memory_space<vmem>>, vector<1x1x128xf32>
    %17 = vector.shape_cast %16 : vector<1x1x128xf32> to vector<1x128xf32>
    %18 = vector.shape_cast %17 : vector<1x128xf32> to vector<1x1x128xf32>
    %19 = vector.broadcast %8 : vector<1x1x1xf32> to vector<1x1x128xf32>
    %20 = arith.mulf %19, %18 : vector<1x1x128xf32>
    %21 = arith.addf %5, %20 : vector<1x1x128xf32>
    %22 = vector.extract_strided_slice %3 {offsets = [0, 0, 1], sizes = [1, 1, 1], strides = [1, 1, 1]} : vector<1x1x3xf32> to vector<1x1x1xf32>
    %23 = vector.shape_cast %22 : vector<1x1x1xf32> to vector<1x1xf32>
    %24 = vector.shape_cast %23 : vector<1x1xf32> to vector<1x1x1xf32>
    %c1 = arith.constant 1 : index
    %c0_13 = arith.constant 0 : index
    %c0_14 = arith.constant 0 : index
    %25 = vector.load %arg3[%c1, %c0_13, %c0_14] : memref<3x32x128xbf16, #tpu.memory_space<vmem>>, vector<1x32x128xbf16>
    %26 = vector.shape_cast %25 : vector<1x32x128xbf16> to vector<32x128xbf16>
    %cst_15 = arith.constant dense<0.000000e+00> : vector<8x128xf32>
    %27 = tpu.matmul %2, %26, %cst_15 {dimension_numbers = #tpu.dot_dimension_numbers<[1], [0], [0], [1], [0, 0, 1, 1], [], []>} : vector<8x32xbf16>, vector<32x128xbf16>, vector<8x128xf32> -> vector<8x128xf32>
    %28 = vector.shape_cast %27 : vector<8x128xf32> to vector<1x8x128xf32>
    %29 = vector.broadcast %24 : vector<1x1x1xf32> to vector<1x8x128xf32>
    %30 = arith.mulf %29, %28 : vector<1x8x128xf32>
    %31 = arith.addf %15, %30 : vector<1x8x128xf32>
    %c1_16 = arith.constant 1 : index
    %c0_17 = arith.constant 0 : index
    %c0_18 = arith.constant 0 : index
    %32 = vector.load %arg4[%c1_16, %c0_17, %c0_18] : memref<3x1x128xf32, #tpu.memory_space<vmem>>, vector<1x1x128xf32>
    %33 = vector.shape_cast %32 : vector<1x1x128xf32> to vector<1x128xf32>
    %34 = vector.shape_cast %33 : vector<1x128xf32> to vector<1x1x128xf32>
    %35 = vector.broadcast %24 : vector<1x1x1xf32> to vector<1x1x128xf32>
    %36 = arith.mulf %35, %34 : vector<1x1x128xf32>
    %37 = arith.addf %21, %36 : vector<1x1x128xf32>
    %38 = vector.extract_strided_slice %3 {offsets = [0, 0, 2], sizes = [1, 1, 1], strides = [1, 1, 1]} : vector<1x1x3xf32> to vector<1x1x1xf32>
    %39 = vector.shape_cast %38 : vector<1x1x1xf32> to vector<1x1xf32>
    %40 = vector.shape_cast %39 : vector<1x1xf32> to vector<1x1x1xf32>
    %c2 = arith.constant 2 : index
    %c0_19 = arith.constant 0 : index
    %c0_20 = arith.constant 0 : index
    %41 = vector.load %arg3[%c2, %c0_19, %c0_20] : memref<3x32x128xbf16, #tpu.memory_space<vmem>>, vector<1x32x128xbf16>
    %42 = vector.shape_cast %41 : vector<1x32x128xbf16> to vector<32x128xbf16>
    %cst_21 = arith.constant dense<0.000000e+00> : vector<8x128xf32>
    %43 = tpu.matmul %2, %42, %cst_21 {dimension_numbers = #tpu.dot_dimension_numbers<[1], [0], [0], [1], [0, 0, 1, 1], [], []>} : vector<8x32xbf16>, vector<32x128xbf16>, vector<8x128xf32> -> vector<8x128xf32>
    %44 = vector.shape_cast %43 : vector<8x128xf32> to vector<1x8x128xf32>
    %45 = vector.broadcast %40 : vector<1x1x1xf32> to vector<1x8x128xf32>
    %46 = arith.mulf %45, %44 : vector<1x8x128xf32>
    %47 = arith.addf %31, %46 : vector<1x8x128xf32>
    %c2_22 = arith.constant 2 : index
    %c0_23 = arith.constant 0 : index
    %c0_24 = arith.constant 0 : index
    %48 = vector.load %arg4[%c2_22, %c0_23, %c0_24] : memref<3x1x128xf32, #tpu.memory_space<vmem>>, vector<1x1x128xf32>
    %49 = vector.shape_cast %48 : vector<1x1x128xf32> to vector<1x128xf32>
    %50 = vector.shape_cast %49 : vector<1x128xf32> to vector<1x1x128xf32>
    %51 = vector.broadcast %40 : vector<1x1x1xf32> to vector<1x1x128xf32>
    %52 = arith.mulf %51, %50 : vector<1x1x128xf32>
    %53 = arith.addf %37, %52 : vector<1x1x128xf32>
    %54 = vector.broadcast %53 : vector<1x1x128xf32> to vector<1x8x128xf32>
    %55 = arith.addf %47, %54 : vector<1x8x128xf32>
    %cst_25 = arith.constant 0.000000e+00 : f32
    %56 = vector.broadcast %cst_25 : f32 to vector<1x8x128xf32>
    %57 = arith.maximumf %55, %56 : vector<1x8x128xf32>
    %cst_26 = arith.constant 0.000000e+00 : f32
    %58 = vector.broadcast %cst_26 : f32 to vector<8x32xf32>
    %cst_27 = arith.constant 0.000000e+00 : f32
    %59 = vector.broadcast %cst_27 : f32 to vector<1x1x32xf32>
    %60 = vector.extract_strided_slice %3 {offsets = [0, 0, 0], sizes = [1, 1, 1], strides = [1, 1, 1]} : vector<1x1x3xf32> to vector<1x1x1xf32>
    %61 = vector.shape_cast %60 : vector<1x1x1xf32> to vector<1x1xf32>
    %62 = vector.shape_cast %61 : vector<1x1xf32> to vector<1x1x1xf32>
    %63 = vector.broadcast %62 : vector<1x1x1xf32> to vector<1x8x128xf32>
    %64 = arith.mulf %63, %57 : vector<1x8x128xf32>
    %65 = arith.truncf %64 : vector<1x8x128xf32> to vector<1x8x128xbf16>
    %66 = vector.shape_cast %65 : vector<1x8x128xbf16> to vector<8x128xbf16>
    %c0_28 = arith.constant 0 : index
    %c0_29 = arith.constant 0 : index
    %c0_30 = arith.constant 0 : index
    %67 = vector.load %arg5[%c0_28, %c0_29, %c0_30] : memref<3x128x32xbf16, #tpu.memory_space<vmem>>, vector<1x128x32xbf16>
    %68 = vector.shape_cast %67 : vector<1x128x32xbf16> to vector<128x32xbf16>
    %cst_31 = arith.constant dense<0.000000e+00> : vector<8x32xf32>
    %69 = tpu.matmul %66, %68, %cst_31 {dimension_numbers = #tpu.dot_dimension_numbers<[1], [0], [0], [1], [0, 0, 1, 1], [], []>} : vector<8x128xbf16>, vector<128x32xbf16>, vector<8x32xf32> -> vector<8x32xf32>
    %70 = arith.addf %58, %69 : vector<8x32xf32>
    %c0_32 = arith.constant 0 : index
    %c0_33 = arith.constant 0 : index
    %c0_34 = arith.constant 0 : index
    %71 = vector.load %arg6[%c0_32, %c0_33, %c0_34] : memref<3x1x32xf32, #tpu.memory_space<vmem>>, vector<1x1x32xf32>
    %72 = vector.shape_cast %71 : vector<1x1x32xf32> to vector<1x32xf32>
    %73 = vector.shape_cast %72 : vector<1x32xf32> to vector<1x1x32xf32>
    %74 = vector.broadcast %62 : vector<1x1x1xf32> to vector<1x1x32xf32>
    %75 = arith.mulf %74, %73 : vector<1x1x32xf32>
    %76 = arith.addf %59, %75 : vector<1x1x32xf32>
    %77 = vector.extract_strided_slice %3 {offsets = [0, 0, 1], sizes = [1, 1, 1], strides = [1, 1, 1]} : vector<1x1x3xf32> to vector<1x1x1xf32>
    %78 = vector.shape_cast %77 : vector<1x1x1xf32> to vector<1x1xf32>
    %79 = vector.shape_cast %78 : vector<1x1xf32> to vector<1x1x1xf32>
    %80 = vector.broadcast %79 : vector<1x1x1xf32> to vector<1x8x128xf32>
    %81 = arith.mulf %80, %57 : vector<1x8x128xf32>
    %82 = arith.truncf %81 : vector<1x8x128xf32> to vector<1x8x128xbf16>
    %83 = vector.shape_cast %82 : vector<1x8x128xbf16> to vector<8x128xbf16>
    %c1_35 = arith.constant 1 : index
    %c0_36 = arith.constant 0 : index
    %c0_37 = arith.constant 0 : index
    %84 = vector.load %arg5[%c1_35, %c0_36, %c0_37] : memref<3x128x32xbf16, #tpu.memory_space<vmem>>, vector<1x128x32xbf16>
    %85 = vector.shape_cast %84 : vector<1x128x32xbf16> to vector<128x32xbf16>
    %cst_38 = arith.constant dense<0.000000e+00> : vector<8x32xf32>
    %86 = tpu.matmul %83, %85, %cst_38 {dimension_numbers = #tpu.dot_dimension_numbers<[1], [0], [0], [1], [0, 0, 1, 1], [], []>} : vector<8x128xbf16>, vector<128x32xbf16>, vector<8x32xf32> -> vector<8x32xf32>
    %87 = arith.addf %70, %86 : vector<8x32xf32>
    %c1_39 = arith.constant 1 : index
    %c0_40 = arith.constant 0 : index
    %c0_41 = arith.constant 0 : index
    %88 = vector.load %arg6[%c1_39, %c0_40, %c0_41] : memref<3x1x32xf32, #tpu.memory_space<vmem>>, vector<1x1x32xf32>
    %89 = vector.shape_cast %88 : vector<1x1x32xf32> to vector<1x32xf32>
    %90 = vector.shape_cast %89 : vector<1x32xf32> to vector<1x1x32xf32>
    %91 = vector.broadcast %79 : vector<1x1x1xf32> to vector<1x1x32xf32>
    %92 = arith.mulf %91, %90 : vector<1x1x32xf32>
    %93 = arith.addf %76, %92 : vector<1x1x32xf32>
    %94 = vector.extract_strided_slice %3 {offsets = [0, 0, 2], sizes = [1, 1, 1], strides = [1, 1, 1]} : vector<1x1x3xf32> to vector<1x1x1xf32>
    %95 = vector.shape_cast %94 : vector<1x1x1xf32> to vector<1x1xf32>
    %96 = vector.shape_cast %95 : vector<1x1xf32> to vector<1x1x1xf32>
    %97 = vector.broadcast %96 : vector<1x1x1xf32> to vector<1x8x128xf32>
    %98 = arith.mulf %97, %57 : vector<1x8x128xf32>
    %99 = arith.truncf %98 : vector<1x8x128xf32> to vector<1x8x128xbf16>
    %100 = vector.shape_cast %99 : vector<1x8x128xbf16> to vector<8x128xbf16>
    %c2_42 = arith.constant 2 : index
    %c0_43 = arith.constant 0 : index
    %c0_44 = arith.constant 0 : index
    %101 = vector.load %arg5[%c2_42, %c0_43, %c0_44] : memref<3x128x32xbf16, #tpu.memory_space<vmem>>, vector<1x128x32xbf16>
    %102 = vector.shape_cast %101 : vector<1x128x32xbf16> to vector<128x32xbf16>
    %cst_45 = arith.constant dense<0.000000e+00> : vector<8x32xf32>
    %103 = tpu.matmul %100, %102, %cst_45 {dimension_numbers = #tpu.dot_dimension_numbers<[1], [0], [0], [1], [0, 0, 1, 1], [], []>} : vector<8x128xbf16>, vector<128x32xbf16>, vector<8x32xf32> -> vector<8x32xf32>
    %104 = arith.addf %87, %103 : vector<8x32xf32>
    %c2_46 = arith.constant 2 : index
    %c0_47 = arith.constant 0 : index
    %c0_48 = arith.constant 0 : index
    %105 = vector.load %arg6[%c2_46, %c0_47, %c0_48] : memref<3x1x32xf32, #tpu.memory_space<vmem>>, vector<1x1x32xf32>
    %106 = vector.shape_cast %105 : vector<1x1x32xf32> to vector<1x32xf32>
    %107 = vector.shape_cast %106 : vector<1x32xf32> to vector<1x1x32xf32>
    %108 = vector.broadcast %96 : vector<1x1x1xf32> to vector<1x1x32xf32>
    %109 = arith.mulf %108, %107 : vector<1x1x32xf32>
    %110 = arith.addf %93, %109 : vector<1x1x32xf32>
    %111 = vector.shape_cast %104 : vector<8x32xf32> to vector<1x8x32xf32>
    %112 = vector.broadcast %110 : vector<1x1x32xf32> to vector<1x8x32xf32>
    %113 = arith.addf %111, %112 : vector<1x8x32xf32>
    %114 = arith.addf %113, %0 : vector<1x8x32xf32>
    %c0_49 = arith.constant 0 : index
    %c0_50 = arith.constant 0 : index
    %c0_51 = arith.constant 0 : index
    %115 = vector.load %arg7[%c0_49, %c0_50, %c0_51] : memref<1x8x32xf32, #tpu.memory_space<vmem>>, vector<1x8x32xf32>
    tpu.vector_store %arg7[%c0_49, %c0_50, %c0_51], %114 {strides = array<i32>} : memref<1x8x32xf32, #tpu.memory_space<vmem>>, vector<1x8x32xf32>,
    return
  }
  func.func @transform_0(%arg0: i32) -> (i32, i32, i32) {
    %c0_i32 = arith.constant 0 : i32
    %c0_i32_0 = arith.constant 0 : i32
    %c0_i32_1 = arith.constant 0 : i32
    return %arg0, %c0_i32, %c0_i32_0 : i32, i32, i32
  }
  func.func @transform_1(%arg0: i32) -> (i32, i32, i32) {
    %c0_i32 = arith.constant 0 : i32
    %c0_i32_0 = arith.constant 0 : i32
    %c0_i32_1 = arith.constant 0 : i32
    return %arg0, %c0_i32, %c0_i32_0 : i32, i32, i32
  }
  func.func @transform_2(%arg0: i32) -> (i32, i32, i32) {
    %c0_i32 = arith.constant 0 : i32
    %c0_i32_0 = arith.constant 0 : i32
    %c0_i32_1 = arith.constant 0 : i32
    %c0_i32_2 = arith.constant 0 : i32
    return %c0_i32, %c0_i32_0, %c0_i32_1 : i32, i32, i32
  }
  func.func @transform_3(%arg0: i32) -> (i32, i32, i32) {
    %c0_i32 = arith.constant 0 : i32
    %c0_i32_0 = arith.constant 0 : i32
    %c0_i32_1 = arith.constant 0 : i32
    %c0_i32_2 = arith.constant 0 : i32
    return %c0_i32, %c0_i32_0, %c0_i32_1 : i32, i32, i32
  }
  func.func @transform_4(%arg0: i32) -> (i32, i32, i32) {
    %c0_i32 = arith.constant 0 : i32
    %c0_i32_0 = arith.constant 0 : i32
    %c0_i32_1 = arith.constant 0 : i32
    %c0_i32_2 = arith.constant 0 : i32
    return %c0_i32, %c0_i32_0, %c0_i32_1 : i32, i32, i32
  }
  func.func @transform_5(%arg0: i32) -> (i32, i32, i32) {
    %c0_i32 = arith.constant 0 : i32
    %c0_i32_0 = arith.constant 0 : i32
    %c0_i32_1 = arith.constant 0 : i32
    %c0_i32_2 = arith.constant 0 : i32
    return %c0_i32, %c0_i32_0, %c0_i32_1 : i32, i32, i32
  }
  func.func @transform_6(%arg0: i32) -> (i32, i32, i32) {
    %c0_i32 = arith.constant 0 : i32
    %c0_i32_0 = arith.constant 0 : i32
    %c0_i32_1 = arith.constant 0 : i32
    return %arg0, %c0_i32, %c0_i32_0 : i32, i32, i32
  }
}

</mosaic_0001>

<llo_original>
// kernel: tpu_custom_call.1
$region0: #{tpu_custom_call.1}
  #allocation0 [shape = 'u32[]', space=smem, size = 0x4, offset = 0x4, fixed_abs, tag = 'smem constant byte address 0x4 - core index']
  #allocation1 [shape = 'u32[144,128]{1,0:T(1,128)}', space=vmem, size = 0x12000, scoped, tag = 'internal scratch']
  %s0 = inlined_call_operand.hbm [shape: f32[8,128], index: 0, kind: input, shape index: {}]
  %s1 = inlined_call_operand.hbm [shape: f32[16,128], index: 1, kind: output, shape index: {}]
  %s2 = sld [smem:[#allocation0]]
  $region41: #{tpu_custom_call.1} parent=0
    _
  %s4 = ssub.s32 1, %s2
  %s5 = scalar_select 0, %s4, %s2
  $region1: #{tpu_custom_call.1} parent=0
    #allocation2 [shape = 'u8[4096]{0}', space=vmem, size = 0x1000, scoped, tag = 'input window, operand 0, single buffered']
    #allocation3 [shape = 's32[2]{0}', space=sflag, size = 0x8, scoped, tag = 'scoped memory for tpu_custom_call.1']
    #allocation4 [shape = 's32[2]{0}', space=sflag, size = 0x8, scoped, tag = 'scoped memory for tpu_custom_call.1']
    #allocation5 [shape = 'u8[8192]{0}', space=vmem, size = 0x2000, scoped, tag = 'output window, operand 0']
    %6 = vsyncpa [#allocation3], 0
    %7 = vsyncpa [#allocation4], 0
    %s8 = scalar_lea.sflag [#allocation4], 1
    %9 = vsyncpa %s8, 0
    loop: start=0, step=1, limit=4
    $region2: #{tpu_custom_call.1} parent=1 // loop_pre_header
      _
    $region3: #{tpu_custom_call.1} parent=1 // loop_header
      %s11 = sphi 0, %s15
      %p12 = scmp.ge.s32.totalorder %s11, 4
      %s19 = sphi 0, %s19
      %s21 = sphi 0, %s19
      %s22 = sphi 0, %s21
      %s36 = sphi 0, %s22
      %s42 = sphi 0, %s44
      %s45 = sphi 0, %s42
      %s46 = sphi 0, %s45
      %s62 = sphi 0, %s46
    $region4: #{tpu_custom_call.1} parent=1 // loop_header_branch
      %14 = sbr.rel (%p12) target = $region8
    $region5: #{tpu_custom_call.1} parent=1 // loop_body
      %s16 = ssub.s32 %s11, 1
      %s17 = ssub.s32 %s11, 2
      %s18 = sadd.s32 %s11, 1
      %s20 = sadd.s32 %s19, 1
      %p23 = scmp.eq.s32.totalorder %s11, 1
      %p24 = scmp.ne.s32.totalorder %s19, %s21
      %p25 = scmp.eq.s32.totalorder %s11, 0
      %p26 = por %p24, %p25
      %p27 = scmp.ne.s32.totalorder %s19, %s21
      %p28 = scmp.eq.s32.totalorder %s16, 1
      %p29 = por %p27, %p28
      %p30 = scmp.ne.s32.totalorder %s21, %s22
      %p31 = scmp.eq.s32.totalorder %s16, 0
      %p32 = por %p30, %p31
      %p33 = scmp.ne.s32.totalorder %s21, %s22
      %p34 = scmp.eq.s32.totalorder %s17, 1
      %p35 = por %p33, %p34
      %p37 = scmp.ne.s32.totalorder %s22, %s36
      %p38 = scmp.eq.s32.totalorder %s17, 0
      %p39 = por %p37, %p38
      %s40 = ssub.s32 %s11, %s18
      %p41 = scmp.eq.s32.totalorder %s40, 0
      %s43 = sadd.s32 %s42, 1
      %s44 = scalar_select %p41, %s42, %s43
      %p47 = pneg %p41
      %p48 = scmp.eq.s32.totalorder %s11, 1
      %p49 = por %p47, %p48
      %p50 = scmp.ne.s32.totalorder %s42, %s45
      %p51 = scmp.eq.s32.totalorder %s11, 0
      %p52 = por %p50, %p51
      %p53 = scmp.ne.s32.totalorder %s42, %s45
      %p54 = scmp.eq.s32.totalorder %s16, 1
      %p55 = por %p53, %p54
      %p56 = scmp.ne.s32.totalorder %s45, %s46
      %p57 = scmp.eq.s32.totalorder %s16, 0
      %p58 = por %p56, %p57
      %p59 = scmp.ne.s32.totalorder %s45, %s46
      %p60 = scmp.eq.s32.totalorder %s17, 1
      %p61 = por %p59, %p60
      %p63 = scmp.ne.s32.totalorder %s46, %s62
      %p64 = scmp.eq.s32.totalorder %s17, 0
      %p65 = por %p63, %p64
      %p66 = scmp.le.s32.totalorder 1, %s11
      %p67 = scmp.lt.s32.totalorder %s11, 3
      %p68 = pnand %p66, %p67
      %p69 = pneg %p68
      // Predicated region
      $region9: #{tpu_custom_call.1} parent=5 // pred_check
        _
      $region10: #{tpu_custom_call.1} parent=5 // pred_check_branch
        %71 = sbr.rel (%p68) target = $region12
      $region11: #{tpu_custom_call.1} parent=5 // pred_region
        %s72 = ssub.s32 %s11, 1
        // Predicated region
        $region13: #{tpu_custom_call.1} parent=11 // pred_check
          %p73 = pneg %p32
        $region14: #{tpu_custom_call.1} parent=11 // pred_check_branch
          %75 = sbr.rel (%p73) target = $region16
        $region15: #{tpu_custom_call.1} parent=11 // pred_region
          %s77 = ssub.s32 128, 128
          %78 = vsyncadd [#allocation3], %s77
          %s80 = sshll.u32 [#allocation2], 4
          %s81 = int_to_ptr.vmem [resolvable:$true] %s80
          %83 = dma.hbm_to_vmem [thread:$0]  %s0, 128, %s81, [#allocation3]
        $region16: #{tpu_custom_call.1} parent=11 // pred_fallthru
          _
      $region12: #{tpu_custom_call.1} parent=5 // pred_fallthru
        _
      %p84 = scmp.lt.s32.totalorder %s11, 2
      // Predicated region
      $region17: #{tpu_custom_call.1} parent=5 // pred_check
        %p85 = pneg %p84
      $region18: #{tpu_custom_call.1} parent=5 // pred_check_branch
        %87 = sbr.rel (%p85) target = $region20
      $region19: #{tpu_custom_call.1} parent=5 // pred_region
        _
      $region20: #{tpu_custom_call.1} parent=5 // pred_fallthru
        _
      %p88 = scmp.le.s32.totalorder 1, %s11
      %p89 = scmp.lt.s32.totalorder %s11, 3
      %p90 = pnand %p88, %p89
      %p91 = pneg %p90
      // Predicated region
      $region21: #{tpu_custom_call.1} parent=5 // pred_check
        _
      $region22: #{tpu_custom_call.1} parent=5 // pred_check_branch
        %93 = sbr.rel (%p90) target = $region24
      $region23: #{tpu_custom_call.1} parent=5 // pred_region
        %s94 = ssub.s32 %s11, 1
        // Predicated region
        $region25: #{tpu_custom_call.1} parent=23 // pred_check
          %p95 = pneg %p32
        $region26: #{tpu_custom_call.1} parent=23 // pred_check_branch
          %97 = sbr.rel (%p95) target = $region28
        $region27: #{tpu_custom_call.1} parent=23 // pred_region
          %98 = dma.done [#allocation3], 128
        $region28: #{tpu_custom_call.1} parent=23 // pred_fallthru
          _
        %p99 = pneg %p32
        %p100 = pneg %p29
        %p101 = pneg %p58
        %p102 = pneg %p55
        %s103 = sand.u32 %s45, 1
        %s104 = scalar_lea.sflag [#allocation4], %s103
        %s105 = sand.u32 %s45, 1
        %s106 = smul.addr %s105, 8
        %s107 = scalar_lea.vmem [#allocation5], %s106
        %v108 = vld [vmem:[#allocation2] sm:$0xff]
        %109 = vst [vmem:[%s107] sm:$0xff] %v108
        %s110 = sand.u32 %s45, 1
        %s111 = scalar_lea.sflag [#allocation4], %s110
        %s112 = sand.u32 %s45, 1
        %s113 = smul.addr %s112, 8
        %s114 = scalar_lea.vmem [#allocation5], %s113
        // Predicated region
        $region29: #{tpu_custom_call.1} parent=23 // pred_check
          %p115 = pneg %p55
        $region30: #{tpu_custom_call.1} parent=23 // pred_check_branch
          %117 = sbr.rel (%p115) target = $region32
        $region31: #{tpu_custom_call.1} parent=23 // pred_region
          %s119 = ssub.s32 128, 128
          %120 = vsyncadd %s111, %s119
          %s121 = smul.addr %s16, 128
          %s122 = scalar_lea.hbm %s1, %s121
          %s124 = sshll.u32 %s114, 4
          %s125 = int_to_ptr.vmem [resolvable:$true] %s124
          %127 = dma.vmem_to_hbm [thread:$0]  %s125, 128, %s122, %s111
        $region32: #{tpu_custom_call.1} parent=23 // pred_fallthru
          _
      $region24: #{tpu_custom_call.1} parent=5 // pred_fallthru
        _
      %p128 = scmp.le.s32.totalorder 2, %s11
      // Predicated region
      $region33: #{tpu_custom_call.1} parent=5 // pred_check
        %p129 = pneg %p128
      $region34: #{tpu_custom_call.1} parent=5 // pred_check_branch
        %131 = sbr.rel (%p129) target = $region36
      $region35: #{tpu_custom_call.1} parent=5 // pred_region
        %s132 = ssub.s32 %s11, 2
        // Predicated region
        $region37: #{tpu_custom_call.1} parent=35 // pred_check
          %p133 = pneg %p61
        $region38: #{tpu_custom_call.1} parent=35 // pred_check_branch
          %135 = sbr.rel (%p133) target = $region40
        $region39: #{tpu_custom_call.1} parent=35 // pred_region
          %s136 = sand.u32 %s46, 1
          %s137 = scalar_lea.sflag [#allocation4], %s136
          %s138 = sand.u32 %s46, 1
          %s139 = smul.addr %s138, 8
          %s140 = scalar_lea.vmem [#allocation5], %s139
          %141 = dma.done %s137, 128
        $region40: #{tpu_custom_call.1} parent=35 // pred_fallthru
          _
      $region36: #{tpu_custom_call.1} parent=5 // pred_fallthru
        _
    $region6: #{tpu_custom_call.1} parent=1 // loop_footer
      %s15 = sadd.s32 1, %s11
    $region7: #{tpu_custom_call.1} parent=1 // loop_footer_branch
      %10 = sbr.rel target = $region3
    $region8: #{tpu_custom_call.1} parent=1 // loop_exit
      _
    %142 = vsyncpa [#allocation3], 1
    %s143 = scalar_lea.sflag [#allocation3], 1
    %144 = vsyncpa %s143, 1
    %145 = vsyncpa [#allocation4], 1
    %s146 = scalar_lea.sflag [#allocation4], 1
    %147 = vsyncpa %s146, 1

// kernel: tpu_custom_call.1
$region0: #{tpu_custom_call.1}
  #allocation0 [shape = 'u32[]', space=smem, size = 0x4, offset = 0x4, fixed_abs, tag = 'smem constant byte address 0x4 - core index']
  #allocation1 [shape = 'u32[144,128]{1,0:T(1,128)}', space=vmem, size = 0x12000, scoped, tag = 'internal scratch']
  %s0 = inlined_call_operand.hbm [shape: f32[2,1,3], index: 0, kind: input, shape index: {}]
  %s1 = inlined_call_operand.hbm [shape: f32[2,8,32], index: 1, kind: input, shape index: {}]
  %s2 = inlined_call_operand.hbm [shape: bf16[3,32,128], index: 2, kind: input, shape index: {}]
  %s3 = inlined_call_operand.hbm [shape: f32[3,1,128], index: 3, kind: input, shape index: {}]
  %s4 = inlined_call_operand.hbm [shape: bf16[3,128,32], index: 4, kind: input, shape index: {}]
  %s5 = inlined_call_operand.hbm [shape: f32[3,1,32], index: 5, kind: input, shape index: {}]
  %s6 = inlined_call_operand.hbm [shape: f32[2,8,32], index: 6, kind: output, shape index: {}]
  %s7 = sld [smem:[#allocation0]]
  $region81: #{tpu_custom_call.1} parent=0
    _
  %s9 = ssub.s32 1, %s7
  %s10 = scalar_select 0, %s9, %s7
  $region1: #{tpu_custom_call.1} parent=0
    #allocation2 [shape = 'u8[1024]{0}', space=vmem, size = 0x400, scoped, tag = 'input window, operand 0']
    #allocation3 [shape = 's32[2]{0}', space=sflag, size = 0x8, scoped, tag = 'scoped memory for tpu_custom_call.1']
    #allocation4 [shape = 's32[2]{0}', space=sflag, size = 0x8, scoped, tag = 'scoped memory for tpu_custom_call.1']
    #allocation5 [shape = 'u8[8192]{0}', space=vmem, size = 0x2000, scoped, tag = 'input window, operand 1']
    #allocation6 [shape = 's32[2]{0}', space=sflag, size = 0x8, scoped, tag = 'scoped memory for tpu_custom_call.1']
    #allocation7 [shape = 'u8[24576]{0}', space=vmem, size = 0x6000, scoped, tag = 'input window, operand 2, single buffered']
    #allocation8 [shape = 'u8[1536]{0}', space=vmem, size = 0x800, scoped, tag = 'input window, operand 3, single buffered']
    #allocation9 [shape = 's32[1]{0}', space=sflag, size = 0x4, scoped, tag = 'scoped memory for tpu_custom_call.1']
    #allocation10 [shape = 'u8[98304]{0}', space=vmem, size = 0x18000, scoped, tag = 'input window, operand 4, single buffered']
    #allocation11 [shape = 'u8[1536]{0}', space=vmem, size = 0x800, scoped, tag = 'input window, operand 5, single buffered']
    #allocation12 [shape = 's32[1]{0}', space=sflag, size = 0x4, scoped, tag = 'scoped memory for tpu_custom_call.1']
    #allocation13 [shape = 'u8[8192]{0}', space=vmem, size = 0x2000, scoped, tag = 'output window, operand 0']
    %11 = vsyncpa [#allocation3], 0
    %s12 = scalar_lea.sflag [#allocation3], 1
    %13 = vsyncpa %s12, 0
    %14 = vsyncpa [#allocation6], 0
    %s15 = scalar_lea.sflag [#allocation6], 1
    %16 = vsyncpa %s15, 0
    %17 = vsyncpa [#allocation9], 0
    %18 = vsyncpa [#allocation12], 0
    %19 = vsyncpa [#allocation4], 0
    %s20 = scalar_lea.sflag [#allocation4], 1
    %21 = vsyncpa %s20, 0
    loop: start=0, step=1, limit=4
    $region2: #{tpu_custom_call.1} parent=1 // loop_pre_header
      _
    $region3: #{tpu_custom_call.1} parent=1 // loop_header
      %s23 = sphi 0, %s27
      %p24 = scmp.ge.s32.totalorder %s23, 4
      %s33 = sphi 0, %s35
      %s36 = sphi 0, %s33
      %s37 = sphi 0, %s36
      %s53 = sphi 0, %s37
      %s59 = sphi 0, %s61
      %s62 = sphi 0, %s59
      %s63 = sphi 0, %s62
      %s79 = sphi 0, %s63
      %s83 = sphi 0, %s83
      %s85 = sphi 0, %s83
      %s86 = sphi 0, %s85
      %s100 = sphi 0, %s86
      %s104 = sphi 0, %s104
      %s106 = sphi 0, %s104
      %s107 = sphi 0, %s106
      %s121 = sphi 0, %s107
      %s125 = sphi 0, %s125
      %s127 = sphi 0, %s125
      %s128 = sphi 0, %s127
      %s142 = sphi 0, %s128
      %s146 = sphi 0, %s146
      %s148 = sphi 0, %s146
      %s149 = sphi 0, %s148
      %s163 = sphi 0, %s149
      %s169 = sphi 0, %s171
      %s172 = sphi 0, %s169
      %s173 = sphi 0, %s172
      %s189 = sphi 0, %s173
    $region4: #{tpu_custom_call.1} parent=1 // loop_header_branch
      %26 = sbr.rel (%p24) target = $region8
    $region5: #{tpu_custom_call.1} parent=1 // loop_body
      %s28 = ssub.s32 %s23, 1
      %s29 = ssub.s32 %s23, 2
      %s30 = sadd.s32 %s23, 1
      %s31 = ssub.s32 %s23, %s30
      %p32 = scmp.eq.s32.totalorder %s31, 0
      %s34 = sadd.s32 %s33, 1
      %s35 = scalar_select %p32, %s33, %s34
      %p38 = pneg %p32
      %p39 = scmp.eq.s32.totalorder %s23, 1
      %p40 = por %p38, %p39
      %p41 = scmp.ne.s32.totalorder %s33, %s36
      %p42 = scmp.eq.s32.totalorder %s23, 0
      %p43 = por %p41, %p42
      %p44 = scmp.ne.s32.totalorder %s33, %s36
      %p45 = scmp.eq.s32.totalorder %s28, 1
      %p46 = por %p44, %p45
      %p47 = scmp.ne.s32.totalorder %s36, %s37
      %p48 = scmp.eq.s32.totalorder %s28, 0
      %p49 = por %p47, %p48
      %p50 = scmp.ne.s32.totalorder %s36, %s37
      %p51 = scmp.eq.s32.totalorder %s29, 1
      %p52 = por %p50, %p51
      %p54 = scmp.ne.s32.totalorder %s37, %s53
      %p55 = scmp.eq.s32.totalorder %s29, 0
      %p56 = por %p54, %p55
      %s57 = ssub.s32 %s23, %s30
      %p58 = scmp.eq.s32.totalorder %s57, 0
      %s60 = sadd.s32 %s59, 1
      %s61 = scalar_select %p58, %s59, %s60
      %p64 = pneg %p58
      %p65 = scmp.eq.s32.totalorder %s23, 1
      %p66 = por %p64, %p65
      %p67 = scmp.ne.s32.totalorder %s59, %s62
      %p68 = scmp.eq.s32.totalorder %s23, 0
      %p69 = por %p67, %p68
      %p70 = scmp.ne.s32.totalorder %s59, %s62
      %p71 = scmp.eq.s32.totalorder %s28, 1
      %p72 = por %p70, %p71
      %p73 = scmp.ne.s32.totalorder %s62, %s63
      %p74 = scmp.eq.s32.totalorder %s28, 0
      %p75 = por %p73, %p74
      %p76 = scmp.ne.s32.totalorder %s62, %s63
      %p77 = scmp.eq.s32.totalorder %s29, 1
      %p78 = por %p76, %p77
      %p80 = scmp.ne.s32.totalorder %s63, %s79
      %p81 = scmp.eq.s32.totalorder %s29, 0
      %p82 = por %p80, %p81
      %s84 = sadd.s32 %s83, 1
      %p87 = scmp.eq.s32.totalorder %s23, 1
      %p88 = scmp.ne.s32.totalorder %s83, %s85
      %p89 = scmp.eq.s32.totalorder %s23, 0
      %p90 = por %p88, %p89
      %p91 = scmp.ne.s32.totalorder %s83, %s85
      %p92 = scmp.eq.s32.totalorder %s28, 1
      %p93 = por %p91, %p92
      %p94 = scmp.ne.s32.totalorder %s85, %s86
      %p95 = scmp.eq.s32.totalorder %s28, 0
      %p96 = por %p94, %p95
      %p97 = scmp.ne.s32.totalorder %s85, %s86
      %p98 = scmp.eq.s32.totalorder %s29, 1
      %p99 = por %p97, %p98
      %p101 = scmp.ne.s32.totalorder %s86, %s100
      %p102 = scmp.eq.s32.totalorder %s29, 0
      %p103 = por %p101, %p102
      %s105 = sadd.s32 %s104, 1
      %p108 = scmp.eq.s32.totalorder %s23, 1
      %p109 = scmp.ne.s32.totalorder %s104, %s106
      %p110 = scmp.eq.s32.totalorder %s23, 0
      %p111 = por %p109, %p110
      %p112 = scmp.ne.s32.totalorder %s104, %s106
      %p113 = scmp.eq.s32.totalorder %s28, 1
      %p114 = por %p112, %p113
      %p115 = scmp.ne.s32.totalorder %s106, %s107
      %p116 = scmp.eq.s32.totalorder %s28, 0
      %p117 = por %p115, %p116
      %p118 = scmp.ne.s32.totalorder %s106, %s107
      %p119 = scmp.eq.s32.totalorder %s29, 1
      %p120 = por %p118, %p119
      %p122 = scmp.ne.s32.totalorder %s107, %s121
      %p123 = scmp.eq.s32.totalorder %s29, 0
      %p124 = por %p122, %p123
      %s126 = sadd.s32 %s125, 1
      %p129 = scmp.eq.s32.totalorder %s23, 1
      %p130 = scmp.ne.s32.totalorder %s125, %s127
      %p131 = scmp.eq.s32.totalorder %s23, 0
      %p132 = por %p130, %p131
      %p133 = scmp.ne.s32.totalorder %s125, %s127
      %p134 = scmp.eq.s32.totalorder %s28, 1
      %p135 = por %p133, %p134
      %p136 = scmp.ne.s32.totalorder %s127, %s128
      %p137 = scmp.eq.s32.totalorder %s28, 0
      %p138 = por %p136, %p137
      %p139 = scmp.ne.s32.totalorder %s127, %s128
      %p140 = scmp.eq.s32.totalorder %s29, 1
      %p141 = por %p139, %p140
      %p143 = scmp.ne.s32.totalorder %s128, %s142
      %p144 = scmp.eq.s32.totalorder %s29, 0
      %p145 = por %p143, %p144
      %s147 = sadd.s32 %s146, 1
      %p150 = scmp.eq.s32.totalorder %s23, 1
      %p151 = scmp.ne.s32.totalorder %s146, %s148
      %p152 = scmp.eq.s32.totalorder %s23, 0
      %p153 = por %p151, %p152
      %p154 = scmp.ne.s32.totalorder %s146, %s148
      %p155 = scmp.eq.s32.totalorder %s28, 1
      %p156 = por %p154, %p155
      %p157 = scmp.ne.s32.totalorder %s148, %s149
      %p158 = scmp.eq.s32.totalorder %s28, 0
      %p159 = por %p157, %p158
      %p160 = scmp.ne.s32.totalorder %s148, %s149
      %p161 = scmp.eq.s32.totalorder %s29, 1
      %p162 = por %p160, %p161
      %p164 = scmp.ne.s32.totalorder %s149, %s163
      %p165 = scmp.eq.s32.totalorder %s29, 0
      %p166 = por %p164, %p165
      %s167 = ssub.s32 %s23, %s30
      %p168 = scmp.eq.s32.totalorder %s167, 0
      %s170 = sadd.s32 %s169, 1
      %s171 = scalar_select %p168, %s169, %s170
      %p174 = pneg %p168
      %p175 = scmp.eq.s32.totalorder %s23, 1
      %p176 = por %p174, %p175
      %p177 = scmp.ne.s32.totalorder %s169, %s172
      %p178 = scmp.eq.s32.totalorder %s23, 0
      %p179 = por %p177, %p178
      %p180 = scmp.ne.s32.totalorder %s169, %s172
      %p181 = scmp.eq.s32.totalorder %s28, 1
      %p182 = por %p180, %p181
      %p183 = scmp.ne.s32.totalorder %s172, %s173
      %p184 = scmp.eq.s32.totalorder %s28, 0
      %p185 = por %p183, %p184
      %p186 = scmp.ne.s32.totalorder %s172, %s173
      %p187 = scmp.eq.s32.totalorder %s29, 1
      %p188 = por %p186, %p187
      %p190 = scmp.ne.s32.totalorder %s173, %s189
      %p191 = scmp.eq.s32.totalorder %s29, 0
      %p192 = por %p190, %p191
      %p193 = scmp.le.s32.totalorder 1, %s23
      %p194 = scmp.lt.s32.totalorder %s23, 3
      %p195 = pnand %p193, %p194
      %p196 = pneg %p195
      // Predicated region
      $region9: #{tpu_custom_call.1} parent=5 // pred_check
        _
      $region10: #{tpu_custom_call.1} parent=5 // pred_check_branch
        %198 = sbr.rel (%p195) target = $region12
      $region11: #{tpu_custom_call.1} parent=5 // pred_region
        %s199 = ssub.s32 %s23, 1
        // Predicated region
        $region13: #{tpu_custom_call.1} parent=11 // pred_check
          %p200 = pneg %p96
        $region14: #{tpu_custom_call.1} parent=11 // pred_check_branch
          %202 = sbr.rel (%p200) target = $region16
        $region15: #{tpu_custom_call.1} parent=11 // pred_region
          %s204 = ssub.s32 768, 768
          %205 = vsyncadd [#allocation6], %s204
          %s206 = sshll.u32 [#allocation7], 4
          %s207 = int_to_ptr.vmem [resolvable:$true] %s206
          %212 = dma.hbm_to_vmem [thread:$0]  %s2, 768, %s207, [#allocation6], 64, 64, 4
        $region16: #{tpu_custom_call.1} parent=11 // pred_fallthru
          _
        // Predicated region
        $region17: #{tpu_custom_call.1} parent=11 // pred_check
          %p213 = pneg %p117
        $region18: #{tpu_custom_call.1} parent=11 // pred_check_branch
          %215 = sbr.rel (%p213) target = $region20
        $region19: #{tpu_custom_call.1} parent=11 // pred_region
          %s217 = ssub.s32 48, 48
          %218 = vsyncadd [#allocation9], %s217
          %s219 = sshll.u32 [#allocation8], 4
          %s220 = int_to_ptr.vmem [resolvable:$true] %s219
          %225 = dma.hbm_to_vmem [thread:$0]  %s3, 48, %s220, [#allocation9], 16, 16, 1
        $region20: #{tpu_custom_call.1} parent=11 // pred_fallthru
          _
        // Predicated region
        $region21: #{tpu_custom_call.1} parent=11 // pred_check
          %p226 = pneg %p138
        $region22: #{tpu_custom_call.1} parent=11 // pred_check_branch
          %228 = sbr.rel (%p226) target = $region24
        $region23: #{tpu_custom_call.1} parent=11 // pred_region
          %s230 = ssub.s32 3072, 3072
          %231 = vsyncadd [#allocation9], %s230
          %s232 = sshll.u32 [#allocation10], 4
          %s233 = int_to_ptr.vmem [resolvable:$true] %s232
          %238 = dma.hbm_to_vmem [thread:$0]  %s4, 3072, %s233, [#allocation9], 64, 64, 4
        $region24: #{tpu_custom_call.1} parent=11 // pred_fallthru
          _
        // Predicated region
        $region25: #{tpu_custom_call.1} parent=11 // pred_check
          %p239 = pneg %p159
        $region26: #{tpu_custom_call.1} parent=11 // pred_check_branch
          %241 = sbr.rel (%p239) target = $region28
        $region27: #{tpu_custom_call.1} parent=11 // pred_region
          %s243 = ssub.s32 48, 48
          %244 = vsyncadd [#allocation12], %s243
          %s245 = sshll.u32 [#allocation11], 4
          %s246 = int_to_ptr.vmem [resolvable:$true] %s245
          %251 = dma.hbm_to_vmem [thread:$0]  %s5, 48, %s246, [#allocation12], 16, 16, 1
        $region28: #{tpu_custom_call.1} parent=11 // pred_fallthru
          _
      $region12: #{tpu_custom_call.1} parent=5 // pred_fallthru
        _
      %p252 = scmp.lt.s32.totalorder %s23, 2
      // Predicated region
      $region29: #{tpu_custom_call.1} parent=5 // pred_check
        %p253 = pneg %p252
      $region30: #{tpu_custom_call.1} parent=5 // pred_check_branch
        %255 = sbr.rel (%p253) target = $region32
      $region31: #{tpu_custom_call.1} parent=5 // pred_region
        // Predicated region
        $region33: #{tpu_custom_call.1} parent=31 // pred_check
          %p256 = pneg %p43
        $region34: #{tpu_custom_call.1} parent=31 // pred_check_branch
          %258 = sbr.rel (%p256) target = $region36
        $region35: #{tpu_custom_call.1} parent=31 // pred_region
          %s259 = sand.u32 %s33, 1
          %s260 = scalar_lea.sflag [#allocation3], %s259
          %s261 = sand.u32 %s33, 1
          %s262 = scalar_lea.vmem [#allocation2], %s261
          %s264 = ssub.s32 16, 16
          %265 = vsyncadd %s260, %s264
          %s266 = smul.addr %s23, 16
          %s267 = scalar_lea.hbm %s0, %s266
          %s269 = sshll.u32 %s262, 4
          %s270 = int_to_ptr.vmem [resolvable:$true] %s269
          %272 = dma.hbm_to_vmem [thread:$0]  %s267, 16, %s270, %s260
        $region36: #{tpu_custom_call.1} parent=31 // pred_fallthru
          _
        // Predicated region
        $region37: #{tpu_custom_call.1} parent=31 // pred_check
          %p273 = pneg %p69
        $region38: #{tpu_custom_call.1} parent=31 // pred_check_branch
          %275 = sbr.rel (%p273) target = $region40
        $region39: #{tpu_custom_call.1} parent=31 // pred_region
          %s276 = sand.u32 %s23, 1
          %s277 = scalar_lea.sflag [#allocation6], %s276
          %s278 = sand.u32 %s59, 1
          %s279 = smul.addr %s278, 8
          %s280 = scalar_lea.vmem [#allocation5], %s279
          %s282 = ssub.s32 128, 128
          %283 = vsyncadd %s277, %s282
          %s284 = smul.addr %s23, 128
          %s285 = scalar_lea.hbm %s1, %s284
          %s287 = sshll.u32 %s280, 4
          %s288 = int_to_ptr.vmem [resolvable:$true] %s287
          %290 = dma.hbm_to_vmem [thread:$0]  %s285, 128, %s288, %s277
        $region40: #{tpu_custom_call.1} parent=31 // pred_fallthru
          _
      $region32: #{tpu_custom_call.1} parent=5 // pred_fallthru
        _
      %p291 = scmp.le.s32.totalorder 1, %s23
      %p292 = scmp.lt.s32.totalorder %s23, 3
      %p293 = pnand %p291, %p292
      %p294 = pneg %p293
      // Predicated region
      $region41: #{tpu_custom_call.1} parent=5 // pred_check
        _
      $region42: #{tpu_custom_call.1} parent=5 // pred_check_branch
        %296 = sbr.rel (%p293) target = $region44
      $region43: #{tpu_custom_call.1} parent=5 // pred_region
        %s297 = ssub.s32 %s23, 1
        %s298 = sand.u32 %s36, 1
        %s299 = scalar_lea.sflag [#allocation3], %s298
        %s300 = sand.u32 %s36, 1
        %s301 = scalar_lea.vmem [#allocation2], %s300
        // Predicated region
        $region45: #{tpu_custom_call.1} parent=43 // pred_check
          %p302 = pneg %p49
        $region46: #{tpu_custom_call.1} parent=43 // pred_check_branch
          %304 = sbr.rel (%p302) target = $region48
        $region47: #{tpu_custom_call.1} parent=43 // pred_region
          %305 = dma.done %s299, 16
        $region48: #{tpu_custom_call.1} parent=43 // pred_fallthru
          _
        %s306 = sand.u32 %s28, 1
        %s307 = scalar_lea.sflag [#allocation6], %s306
        %s308 = sand.u32 %s62, 1
        %s309 = smul.addr %s308, 8
        %s310 = scalar_lea.vmem [#allocation5], %s309
        // Predicated region
        $region49: #{tpu_custom_call.1} parent=43 // pred_check
          %p311 = pneg %p75
        $region50: #{tpu_custom_call.1} parent=43 // pred_check_branch
          %313 = sbr.rel (%p311) target = $region52
        $region51: #{tpu_custom_call.1} parent=43 // pred_region
          %314 = dma.done %s307, 128
        $region52: #{tpu_custom_call.1} parent=43 // pred_fallthru
          _
        // Predicated region
        $region53: #{tpu_custom_call.1} parent=43 // pred_check
          %p315 = pneg %p96
        $region54: #{tpu_custom_call.1} parent=43 // pred_check_branch
          %317 = sbr.rel (%p315) target = $region56
        $region55: #{tpu_custom_call.1} parent=43 // pred_region
          %318 = dma.done [#allocation6], 768
        $region56: #{tpu_custom_call.1} parent=43 // pred_fallthru
          _
        // Predicated region
        $region57: #{tpu_custom_call.1} parent=43 // pred_check
          %p319 = pneg %p117
        $region58: #{tpu_custom_call.1} parent=43 // pred_check_branch
          %321 = sbr.rel (%p319) target = $region60
        $region59: #{tpu_custom_call.1} parent=43 // pred_region
          %322 = dma.done [#allocation9], 48
        $region60: #{tpu_custom_call.1} parent=43 // pred_fallthru
          _
        // Predicated region
        $region61: #{tpu_custom_call.1} parent=43 // pred_check
          %p323 = pneg %p138
        $region62: #{tpu_custom_call.1} parent=43 // pred_check_branch
          %325 = sbr.rel (%p323) target = $region64
        $region63: #{tpu_custom_call.1} parent=43 // pred_region
          %326 = dma.done [#allocation9], 3072
        $region64: #{tpu_custom_call.1} parent=43 // pred_fallthru
          _
        // Predicated region
        $region65: #{tpu_custom_call.1} parent=43 // pred_check
          %p327 = pneg %p159
        $region66: #{tpu_custom_call.1} parent=43 // pred_check_branch
          %329 = sbr.rel (%p327) target = $region68
        $region67: #{tpu_custom_call.1} parent=43 // pred_region
          %330 = dma.done [#allocation12], 48
        $region68: #{tpu_custom_call.1} parent=43 // pred_fallthru
          _
        %s331 = sand.u32 %s36, 1
        %s332 = scalar_lea.sflag [#allocation3], %s331
        %s333 = sand.u32 %s36, 1
        %s334 = scalar_lea.vmem [#allocation2], %s333
        %p335 = pneg %p49
        %p336 = pneg %p46
        %s337 = sand.u32 %s28, 1
        %s338 = scalar_lea.sflag [#allocation6], %s337
        %s339 = sand.u32 %s62, 1
        %s340 = smul.addr %s339, 8
        %s341 = scalar_lea.vmem [#allocation5], %s340
        %p342 = pneg %p75
        %p343 = pneg %p72
        %p344 = pneg %p96
        %p345 = pneg %p93
        %p346 = pneg %p117
        %p347 = pneg %p114
        %p348 = pneg %p138
        %p349 = pneg %p135
        %p350 = pneg %p159
        %p351 = pneg %p156
        %p352 = pneg %p185
        %p353 = pneg %p182
        %s354 = sand.u32 %s172, 1
        %s355 = scalar_lea.sflag [#allocation4], %s354
        %s356 = sand.u32 %s172, 1
        %s357 = smul.addr %s356, 8
        %s358 = scalar_lea.vmem [#allocation13], %s357
        %v360 = vld [vmem:[%s310] sm:$0xff]
        %v361 = vpack.c.bf16 %v360, %v360
        %v362 = vld [vmem:[%s301] sm:$0x1]
        %v363 = vld [vmem:[#allocation7] sm:$0xf]
        %v364 = vld [vmem:[#allocation7 + $0x4] sm:$0xf]
        %v365 = vld [vmem:[#allocation7 + $0x8] sm:$0xf]
        %v366 = vld [vmem:[#allocation7 + $0xc] sm:$0xf]
        %v371 = vunpack.c.l.b16 %v363
        %v372 = vunpack.c.l.b16 %v364
        %v373 = vunpack.c.l.b16 %v365
        %v374 = vunpack.c.l.b16 %v366
        %v375 = vpack.c.b16 %v372, %v371
        %v376 = vpack.c.b16 %v374, %v373
        %vm379 = vcmask 261120
        %v381 = vsel %vm379, %v361, 0
        %383 = vmatprep.subr.bf16.mxu0 0
        %384 = vmatpush1.bf16.msra.mxu0 %v375
        %385 = vmatprep.subr.bf16.mxu0 0
        %386 = vmatpush1.bf16.msra.mxu0 %v376
        %387 = vmatprep.subr.bf16.mxu0 0
        %388 = vmatpush1.bf16.msra.mxu0 0
        %389 = vmatprep.subr.bf16.mxu0 0
        %390 = vmatpush1.bf16.msra.mxu0 0
        %391 = vmatprep.subr.bf16.mxu0 0
        %392 = vmatpush1.bf16.msra.mxu0 0
        %393 = vmatprep.subr.bf16.mxu0 0
        %394 = vmatpush1.bf16.msra.mxu0 0
        %395 = vmatprep.subr.bf16.mxu0 0
        %396 = vmatpush1.bf16.msra.mxu0 0
        %397 = vmatprep.subr.bf16.mxu0 0
        %398 = vmatpush1.bf16.msra.mxu0 0
        %399 = vmatprep.subr.bf16.mxu0 0
        %400 = vmatpush1.bf16.msra.mxu0 0
        %401 = vmatprep.subr.bf16.mxu0 0
        %402 = vmatpush1.bf16.msra.mxu0 0
        %403 = vmatprep.subr.bf16.mxu0 0
        %404 = vmatpush1.bf16.msra.mxu0 0
        %405 = vmatprep.subr.bf16.mxu0 0
        %406 = vmatpush1.bf16.msra.mxu0 0
        %407 = vmatprep.subr.bf16.mxu0 0
        %408 = vmatpush1.bf16.msra.mxu0 0
        %409 = vmatprep.subr.bf16.mxu0 0
        %410 = vmatpush1.bf16.msra.mxu0 0
        %411 = vmatprep.subr.bf16.mxu0 0
        %412 = vmatpush1.bf16.msra.mxu0 0
        %413 = vmatprep.subr.bf16.mxu0 0
        %414 = vmatpush1.bf16.msra.mxu0 0
        %415 = vmatprep.mubr.bf16.mxu0 0
        %416 = vmatmul.mubr.bf16.gmra.mrb[0].mxu0 %v381
        %v417 = vpop.f32.mrb[0].mxu0
        %v418 = vadd.f32 0.0, %v417
        %v419 = vpop.f32.mrb[0].mxu0
        %v420 = vpop.f32.mrb[0].mxu0
        %v421 = vpop.f32.mrb[0].mxu0
        %422 = vdwg.mxu0
        %v424 = vlaneseq
        %v425 = vshrl.u32 %v424, 7
        %v426 = vsub.s32 0, %v425
        %v427 = vrot.slane %v362, %v426
        %428 = vset.pattern.permute.xlu0 0
        %429 = vperm.xlu0 %428, %v427
        %v430 = vpop.permute.xlu0 %429
        %v432 = vmul.f32 %v430, %v418
        %v433 = vadd.f32 %v432, 0.0
        %v434 = vld [vmem:[#allocation8] sm:$0x1]
        %435 = vset.pattern.permute.xlu0 0
        %436 = vperm.xlu0 %435, %v362
        %v437 = vpop.permute.xlu0 %436
        %v439 = vlaneseq
        %v440 = vshrl.u32 %v439, 7
        %v441 = vsub.s32 0, %v440
        %v442 = vrot.slane %v437, %v441
        %v443 = vmul.f32 %v442, %v434
        %v444 = vadd.f32 %v443, 0.0
        %s445 = scalar_lea.vmem [#allocation7], 16
        %v446 = vld [vmem:[%s445] sm:$0xf]
        %v447 = vld [vmem:[%s445 + $0x4] sm:$0xf]
        %v448 = vld [vmem:[%s445 + $0x8] sm:$0xf]
        %v449 = vld [vmem:[%s445 + $0xc] sm:$0xf]
        %v454 = vunpack.c.l.b16 %v446
        %v455 = vunpack.c.l.b16 %v447
        %v456 = vunpack.c.l.b16 %v448
        %v457 = vunpack.c.l.b16 %v449
        %v458 = vpack.c.b16 %v455, %v454
        %v459 = vpack.c.b16 %v457, %v456
        %462 = vmatprep.subr.bf16.mxu0 0
        %463 = vmatpush1.bf16.msra.mxu0 %v458
        %464 = vmatprep.subr.bf16.mxu0 0
        %465 = vmatpush1.bf16.msra.mxu0 %v459
        %466 = vmatprep.subr.bf16.mxu0 0
        %467 = vmatpush1.bf16.msra.mxu0 0
        %468 = vmatprep.subr.bf16.mxu0 0
        %469 = vmatpush1.bf16.msra.mxu0 0
        %470 = vmatprep.subr.bf16.mxu0 0
        %471 = vmatpush1.bf16.msra.mxu0 0
        %472 = vmatprep.subr.bf16.mxu0 0
        %473 = vmatpush1.bf16.msra.mxu0 0
        %474 = vmatprep.subr.bf16.mxu0 0
        %475 = vmatpush1.bf16.msra.mxu0 0
        %476 = vmatprep.subr.bf16.mxu0 0
        %477 = vmatpush1.bf16.msra.mxu0 0
        %478 = vmatprep.subr.bf16.mxu0 0
        %479 = vmatpush1.bf16.msra.mxu0 0
        %480 = vmatprep.subr.bf16.mxu0 0
        %481 = vmatpush1.bf16.msra.mxu0 0
        %482 = vmatprep.subr.bf16.mxu0 0
        %483 = vmatpush1.bf16.msra.mxu0 0
        %484 = vmatprep.subr.bf16.mxu0 0
        %485 = vmatpush1.bf16.msra.mxu0 0
        %486 = vmatprep.subr.bf16.mxu0 0
        %487 = vmatpush1.bf16.msra.mxu0 0
        %488 = vmatprep.subr.bf16.mxu0 0
        %489 = vmatpush1.bf16.msra.mxu0 0
        %490 = vmatprep.subr.bf16.mxu0 0
        %491 = vmatpush1.bf16.msra.mxu0 0
        %492 = vmatprep.subr.bf16.mxu0 0
        %493 = vmatpush1.bf16.msra.mxu0 0
        %494 = vmatprep.mubr.bf16.mxu0 0
        %495 = vmatmul.mubr.bf16.gmra.mrb[0].mxu0 %v381
        %v496 = vpop.f32.mrb[0].mxu0
        %v497 = vadd.f32 0.0, %v496
        %v498 = vpop.f32.mrb[0].mxu0
        %v499 = vpop.f32.mrb[0].mxu0
        %v500 = vpop.f32.mrb[0].mxu0
        %501 = vdwg.mxu0
        %502 = vset.pattern.permute.xlu0 1
        %503 = vperm.xlu0 %502, %v427
        %v504 = vpop.permute.xlu0 %503
        %v506 = vmul.f32 %v504, %v497
        %v507 = vadd.f32 %v433, %v506
        %s508 = scalar_lea.vmem [#allocation8], 1
        %v509 = vld [vmem:[%s508] sm:$0x1]
        %510 = vset.pattern.permute.xlu0 1
        %511 = vperm.xlu0 %510, %v362
        %v512 = vpop.permute.xlu0 %511
        %v514 = vlaneseq
        %v515 = vshrl.u32 %v514, 7
        %v516 = vsub.s32 0, %v515
        %v517 = vrot.slane %v512, %v516
        %v518 = vmul.f32 %v517, %v509
        %v519 = vadd.f32 %v444, %v518
        %s520 = scalar_lea.vmem [#allocation7], 32
        %v521 = vld [vmem:[%s520] sm:$0xf]
        %v522 = vld [vmem:[%s520 + $0x4] sm:$0xf]
        %v523 = vld [vmem:[%s520 + $0x8] sm:$0xf]
        %v524 = vld [vmem:[%s520 + $0xc] sm:$0xf]
        %v529 = vunpack.c.l.b16 %v521
        %v530 = vunpack.c.l.b16 %v522
        %v531 = vunpack.c.l.b16 %v523
        %v532 = vunpack.c.l.b16 %v524
        %v533 = vpack.c.b16 %v530, %v529
        %v534 = vpack.c.b16 %v532, %v531
        %537 = vmatprep.subr.bf16.mxu0 0
        %538 = vmatpush1.bf16.msra.mxu0 %v533
        %539 = vmatprep.subr.bf16.mxu0 0
        %540 = vmatpush1.bf16.msra.mxu0 %v534
        %541 = vmatprep.subr.bf16.mxu0 0
        %542 = vmatpush1.bf16.msra.mxu0 0
        %543 = vmatprep.subr.bf16.mxu0 0
        %544 = vmatpush1.bf16.msra.mxu0 0
        %545 = vmatprep.subr.bf16.mxu0 0
        %546 = vmatpush1.bf16.msra.mxu0 0
        %547 = vmatprep.subr.bf16.mxu0 0
        %548 = vmatpush1.bf16.msra.mxu0 0
        %549 = vmatprep.subr.bf16.mxu0 0
        %550 = vmatpush1.bf16.msra.mxu0 0
        %551 = vmatprep.subr.bf16.mxu0 0
        %552 = vmatpush1.bf16.msra.mxu0 0
        %553 = vmatprep.subr.bf16.mxu0 0
        %554 = vmatpush1.bf16.msra.mxu0 0
        %555 = vmatprep.subr.bf16.mxu0 0
        %556 = vmatpush1.bf16.msra.mxu0 0
        %557 = vmatprep.subr.bf16.mxu0 0
        %558 = vmatpush1.bf16.msra.mxu0 0
        %559 = vmatprep.subr.bf16.mxu0 0
        %560 = vmatpush1.bf16.msra.mxu0 0
        %561 = vmatprep.subr.bf16.mxu0 0
        %562 = vmatpush1.bf16.msra.mxu0 0
        %563 = vmatprep.subr.bf16.mxu0 0
        %564 = vmatpush1.bf16.msra.mxu0 0
        %565 = vmatprep.subr.bf16.mxu0 0
        %566 = vmatpush1.bf16.msra.mxu0 0
        %567 = vmatprep.subr.bf16.mxu0 0
        %568 = vmatpush1.bf16.msra.mxu0 0
        %569 = vmatprep.mubr.bf16.mxu0 0
        %570 = vmatmul.mubr.bf16.gmra.mrb[0].mxu0 %v381
        %v571 = vpop.f32.mrb[0].mxu0
        %v572 = vadd.f32 0.0, %v571
        %v573 = vpop.f32.mrb[0].mxu0
        %v574 = vpop.f32.mrb[0].mxu0
        %v575 = vpop.f32.mrb[0].mxu0
        %576 = vdwg.mxu0
        %577 = vset.pattern.permute.xlu0 2
        %578 = vperm.xlu0 %577, %v427
        %v579 = vpop.permute.xlu0 %578
        %v581 = vmul.f32 %v579, %v572
        %v582 = vadd.f32 %v507, %v581
        %s583 = scalar_lea.vmem [#allocation8], 2
        %v584 = vld [vmem:[%s583] sm:$0x1]
        %585 = vset.pattern.permute.xlu0 2
        %586 = vperm.xlu0 %585, %v362
        %v587 = vpop.permute.xlu0 %586
        %v589 = vlaneseq
        %v590 = vshrl.u32 %v589, 7
        %v591 = vsub.s32 0, %v590
        %v592 = vrot.slane %v587, %v591
        %v593 = vmul.f32 %v592, %v584
        %v594 = vadd.f32 %v519, %v593
        %v596 = vlaneseq
        %v597 = vshrl.u32 %v596, 7
        %v598 = vsub.s32 0, %v597
        %v599 = vrot.slane %v594, %v598
        %v601 = vadd.f32 %v582, %v599
        %v602 = vmax.f32 %v601, 0.0
        %v603 = vmul.f32 %v430, %v602
        %v604 = vpack.c.bf16 %v603, %v603
        %v605 = vld [vmem:[#allocation10] sm:$0xf]
        %v606 = vld [vmem:[#allocation10 + $0x4] sm:$0xf]
        %v607 = vld [vmem:[#allocation10 + $0x8] sm:$0xf]
        %v608 = vld [vmem:[#allocation10 + $0xc] sm:$0xf]
        %v609 = vld [vmem:[#allocation10 + $0x10] sm:$0xf]
        %v610 = vld [vmem:[#allocation10 + $0x14] sm:$0xf]
        %v611 = vld [vmem:[#allocation10 + $0x18] sm:$0xf]
        %v612 = vld [vmem:[#allocation10 + $0x1c] sm:$0xf]
        %v613 = vld [vmem:[#allocation10 + $0x20] sm:$0xf]
        %v614 = vld [vmem:[#allocation10 + $0x24] sm:$0xf]
        %v615 = vld [vmem:[#allocation10 + $0x28] sm:$0xf]
        %v616 = vld [vmem:[#allocation10 + $0x2c] sm:$0xf]
        %v617 = vld [vmem:[#allocation10 + $0x30] sm:$0xf]
        %v618 = vld [vmem:[#allocation10 + $0x34] sm:$0xf]
        %v619 = vld [vmem:[#allocation10 + $0x38] sm:$0xf]
        %v620 = vld [vmem:[#allocation10 + $0x3c] sm:$0xf]
        %v621 = vld [vmem:[#allocation11] sm:$0x1]
        %v622 = vmul.f32 %v442, %v621
        %v623 = vadd.f32 %v622, 0.0
        %v624 = vmul.f32 %v504, %v602
        %v625 = vpack.c.bf16 %v624, %v624
        %s626 = scalar_lea.vmem [#allocation10], 64
        %v627 = vld [vmem:[%s626] sm:$0xf]
        %v628 = vld [vmem:[%s626 + $0x4] sm:$0xf]
        %v629 = vld [vmem:[%s626 + $0x8] sm:$0xf]
        %v630 = vld [vmem:[%s626 + $0xc] sm:$0xf]
        %v631 = vld [vmem:[%s626 + $0x10] sm:$0xf]
        %v632 = vld [vmem:[%s626 + $0x14] sm:$0xf]
        %v633 = vld [vmem:[%s626 + $0x18] sm:$0xf]
        %v634 = vld [vmem:[%s626 + $0x1c] sm:$0xf]
        %v635 = vld [vmem:[%s626 + $0x20] sm:$0xf]
        %v636 = vld [vmem:[%s626 + $0x24] sm:$0xf]
        %v637 = vld [vmem:[%s626 + $0x28] sm:$0xf]
        %v638 = vld [vmem:[%s626 + $0x2c] sm:$0xf]
        %v639 = vld [vmem:[%s626 + $0x30] sm:$0xf]
        %v640 = vld [vmem:[%s626 + $0x34] sm:$0xf]
        %v641 = vld [vmem:[%s626 + $0x38] sm:$0xf]
        %v642 = vld [vmem:[%s626 + $0x3c] sm:$0xf]
        %v659 = vunpack.c.l.b16 %v627
        %v660 = vunpack.c.l.b16 %v628
        %v661 = vunpack.c.l.b16 %v629
        %v662 = vunpack.c.l.b16 %v630
        %v663 = vunpack.c.l.b16 %v631
        %v664 = vunpack.c.l.b16 %v632
        %v665 = vunpack.c.l.b16 %v633
        %v666 = vunpack.c.l.b16 %v634
        %v667 = vunpack.c.l.b16 %v635
        %v668 = vunpack.c.l.b16 %v636
        %v669 = vunpack.c.l.b16 %v637
        %v670 = vunpack.c.l.b16 %v638
        %v671 = vunpack.c.l.b16 %v639
        %v672 = vunpack.c.l.b16 %v640
        %v673 = vunpack.c.l.b16 %v641
        %v674 = vunpack.c.l.b16 %v642
        %v675 = vpack.c.b16 %v660, %v659
        %v676 = vpack.c.b16 %v662, %v661
        %v677 = vpack.c.b16 %v664, %v663
        %v678 = vpack.c.b16 %v666, %v665
        %v679 = vpack.c.b16 %v668, %v667
        %v680 = vpack.c.b16 %v670, %v669
        %v681 = vpack.c.b16 %v672, %v671
        %v682 = vpack.c.b16 %v674, %v673
        %691 = vmatprep.subr.bf16.mxu0 0
        %692 = vmatpush1.bf16.msra.mxu0 %v675
        %693 = vmatprep.subr.bf16.mxu0 0
        %694 = vmatpush1.bf16.msra.mxu0 %v676
        %695 = vmatprep.subr.bf16.mxu0 0
        %696 = vmatpush1.bf16.msra.mxu0 %v677
        %697 = vmatprep.subr.bf16.mxu0 0
        %698 = vmatpush1.bf16.msra.mxu0 %v678
        %699 = vmatprep.subr.bf16.mxu0 0
        %700 = vmatpush1.bf16.msra.mxu0 %v679
        %701 = vmatprep.subr.bf16.mxu0 0
        %702 = vmatpush1.bf16.msra.mxu0 %v680
        %703 = vmatprep.subr.bf16.mxu0 0
        %704 = vmatpush1.bf16.msra.mxu0 %v681
        %705 = vmatprep.subr.bf16.mxu0 0
        %706 = vmatpush1.bf16.msra.mxu0 %v682
        %707 = vmatprep.subr.bf16.mxu0 0
        %708 = vmatpush1.bf16.msra.mxu0 0
        %709 = vmatprep.subr.bf16.mxu0 0
        %710 = vmatpush1.bf16.msra.mxu0 0
        %711 = vmatprep.subr.bf16.mxu0 0
        %712 = vmatpush1.bf16.msra.mxu0 0
        %713 = vmatprep.subr.bf16.mxu0 0
        %714 = vmatpush1.bf16.msra.mxu0 0
        %715 = vmatprep.subr.bf16.mxu0 0
        %716 = vmatpush1.bf16.msra.mxu0 0
        %717 = vmatprep.subr.bf16.mxu0 0
        %718 = vmatpush1.bf16.msra.mxu0 0
        %719 = vmatprep.subr.bf16.mxu0 0
        %720 = vmatpush1.bf16.msra.mxu0 0
        %721 = vmatprep.subr.bf16.mxu0 0
        %722 = vmatpush1.bf16.msra.mxu0 0
        %723 = vmatprep.mubr.bf16.mxu0 0
        %724 = vmatmul.mubr.bf16.gmra.mrb[0].mxu0 %v625
        %v725 = vpop.f32.mrb[0].mxu0
        %v726 = vadd.f32 0.0, %v725
        %v727 = vpop.f32.mrb[0].mxu0
        %v728 = vpop.f32.mrb[0].mxu0
        %v729 = vpop.f32.mrb[0].mxu0
        %730 = vdwg.mxu0
        %v747 = vunpack.c.l.b16 %v605
        %v748 = vunpack.c.l.b16 %v606
        %v749 = vunpack.c.l.b16 %v607
        %v750 = vunpack.c.l.b16 %v608
        %v751 = vunpack.c.l.b16 %v609
        %v752 = vunpack.c.l.b16 %v610
        %v753 = vunpack.c.l.b16 %v611
        %v754 = vunpack.c.l.b16 %v612
        %v755 = vunpack.c.l.b16 %v613
        %v756 = vunpack.c.l.b16 %v614
        %v757 = vunpack.c.l.b16 %v615
        %v758 = vunpack.c.l.b16 %v616
        %v759 = vunpack.c.l.b16 %v617
        %v760 = vunpack.c.l.b16 %v618
        %v761 = vunpack.c.l.b16 %v619
        %v762 = vunpack.c.l.b16 %v620
        %v763 = vpack.c.b16 %v748, %v747
        %v764 = vpack.c.b16 %v750, %v749
        %v765 = vpack.c.b16 %v752, %v751
        %v766 = vpack.c.b16 %v754, %v753
        %v767 = vpack.c.b16 %v756, %v755
        %v768 = vpack.c.b16 %v758, %v757
        %v769 = vpack.c.b16 %v760, %v759
        %v770 = vpack.c.b16 %v762, %v761
        %779 = vmatprep.subr.bf16.mxu0 0
        %780 = vmatpush1.bf16.msra.mxu0 %v763
        %781 = vmatprep.subr.bf16.mxu0 0
        %782 = vmatpush1.bf16.msra.mxu0 %v764
        %783 = vmatprep.subr.bf16.mxu0 0
        %784 = vmatpush1.bf16.msra.mxu0 %v765
        %785 = vmatprep.subr.bf16.mxu0 0
        %786 = vmatpush1.bf16.msra.mxu0 %v766
        %787 = vmatprep.subr.bf16.mxu0 0
        %788 = vmatpush1.bf16.msra.mxu0 %v767
        %789 = vmatprep.subr.bf16.mxu0 0
        %790 = vmatpush1.bf16.msra.mxu0 %v768
        %791 = vmatprep.subr.bf16.mxu0 0
        %792 = vmatpush1.bf16.msra.mxu0 %v769
        %793 = vmatprep.subr.bf16.mxu0 0
        %794 = vmatpush1.bf16.msra.mxu0 %v770
        %795 = vmatprep.subr.bf16.mxu0 0
        %796 = vmatpush1.bf16.msra.mxu0 0
        %797 = vmatprep.subr.bf16.mxu0 0
        %798 = vmatpush1.bf16.msra.mxu0 0
        %799 = vmatprep.subr.bf16.mxu0 0
        %800 = vmatpush1.bf16.msra.mxu0 0
        %801 = vmatprep.subr.bf16.mxu0 0
        %802 = vmatpush1.bf16.msra.mxu0 0
        %803 = vmatprep.subr.bf16.mxu0 0
        %804 = vmatpush1.bf16.msra.mxu0 0
        %805 = vmatprep.subr.bf16.mxu0 0
        %806 = vmatpush1.bf16.msra.mxu0 0
        %807 = vmatprep.subr.bf16.mxu0 0
        %808 = vmatpush1.bf16.msra.mxu0 0
        %809 = vmatprep.subr.bf16.mxu0 0
        %810 = vmatpush1.bf16.msra.mxu0 0
        %811 = vmatprep.mubr.bf16.mxu0 0
        %812 = vmatmul.mubr.bf16.gmra.mrb[0].mxu0 %v604
        %v813 = vpop.f32.mrb[0].mxu0
        %v814 = vadd.f32 %v726, %v813
        %v815 = vpop.f32.mrb[0].mxu0
        %v816 = vpop.f32.mrb[0].mxu0
        %v817 = vpop.f32.mrb[0].mxu0
        %818 = vdwg.mxu0
        %s819 = scalar_lea.vmem [#allocation11], 1
        %v820 = vld [vmem:[%s819] sm:$0x1]
        %v821 = vmul.f32 %v517, %v820
        %v822 = vadd.f32 %v623, %v821
        %v823 = vmul.f32 %v579, %v602
        %v824 = vpack.c.bf16 %v823, %v823
        %s825 = scalar_lea.vmem [#allocation10], 128
        %v826 = vld [vmem:[%s825] sm:$0xf]
        %v827 = vld [vmem:[%s825 + $0x4] sm:$0xf]
        %v828 = vld [vmem:[%s825 + $0x8] sm:$0xf]
        %v829 = vld [vmem:[%s825 + $0xc] sm:$0xf]
        %v830 = vld [vmem:[%s825 + $0x10] sm:$0xf]
        %v831 = vld [vmem:[%s825 + $0x14] sm:$0xf]
        %v832 = vld [vmem:[%s825 + $0x18] sm:$0xf]
        %v833 = vld [vmem:[%s825 + $0x1c] sm:$0xf]
        %v834 = vld [vmem:[%s825 + $0x20] sm:$0xf]
        %v835 = vld [vmem:[%s825 + $0x24] sm:$0xf]
        %v836 = vld [vmem:[%s825 + $0x28] sm:$0xf]
        %v837 = vld [vmem:[%s825 + $0x2c] sm:$0xf]
        %v838 = vld [vmem:[%s825 + $0x30] sm:$0xf]
        %v839 = vld [vmem:[%s825 + $0x34] sm:$0xf]
        %v840 = vld [vmem:[%s825 + $0x38] sm:$0xf]
        %v841 = vld [vmem:[%s825 + $0x3c] sm:$0xf]
        %v858 = vunpack.c.l.b16 %v826
        %v859 = vunpack.c.l.b16 %v827
        %v860 = vunpack.c.l.b16 %v828
        %v861 = vunpack.c.l.b16 %v829
        %v862 = vunpack.c.l.b16 %v830
        %v863 = vunpack.c.l.b16 %v831
        %v864 = vunpack.c.l.b16 %v832
        %v865 = vunpack.c.l.b16 %v833
        %v866 = vunpack.c.l.b16 %v834
        %v867 = vunpack.c.l.b16 %v835
        %v868 = vunpack.c.l.b16 %v836
        %v869 = vunpack.c.l.b16 %v837
        %v870 = vunpack.c.l.b16 %v838
        %v871 = vunpack.c.l.b16 %v839
        %v872 = vunpack.c.l.b16 %v840
        %v873 = vunpack.c.l.b16 %v841
        %v874 = vpack.c.b16 %v859, %v858
        %v875 = vpack.c.b16 %v861, %v860
        %v876 = vpack.c.b16 %v863, %v862
        %v877 = vpack.c.b16 %v865, %v864
        %v878 = vpack.c.b16 %v867, %v866
        %v879 = vpack.c.b16 %v869, %v868
        %v880 = vpack.c.b16 %v871, %v870
        %v881 = vpack.c.b16 %v873, %v872
        %890 = vmatprep.subr.bf16.mxu0 0
        %891 = vmatpush1.bf16.msra.mxu0 %v874
        %892 = vmatprep.subr.bf16.mxu0 0
        %893 = vmatpush1.bf16.msra.mxu0 %v875
        %894 = vmatprep.subr.bf16.mxu0 0
        %895 = vmatpush1.bf16.msra.mxu0 %v876
        %896 = vmatprep.subr.bf16.mxu0 0
        %897 = vmatpush1.bf16.msra.mxu0 %v877
        %898 = vmatprep.subr.bf16.mxu0 0
        %899 = vmatpush1.bf16.msra.mxu0 %v878
        %900 = vmatprep.subr.bf16.mxu0 0
        %901 = vmatpush1.bf16.msra.mxu0 %v879
        %902 = vmatprep.subr.bf16.mxu0 0
        %903 = vmatpush1.bf16.msra.mxu0 %v880
        %904 = vmatprep.subr.bf16.mxu0 0
        %905 = vmatpush1.bf16.msra.mxu0 %v881
        %906 = vmatprep.subr.bf16.mxu0 0
        %907 = vmatpush1.bf16.msra.mxu0 0
        %908 = vmatprep.subr.bf16.mxu0 0
        %909 = vmatpush1.bf16.msra.mxu0 0
        %910 = vmatprep.subr.bf16.mxu0 0
        %911 = vmatpush1.bf16.msra.mxu0 0
        %912 = vmatprep.subr.bf16.mxu0 0
        %913 = vmatpush1.bf16.msra.mxu0 0
        %914 = vmatprep.subr.bf16.mxu0 0
        %915 = vmatpush1.bf16.msra.mxu0 0
        %916 = vmatprep.subr.bf16.mxu0 0
        %917 = vmatpush1.bf16.msra.mxu0 0
        %918 = vmatprep.subr.bf16.mxu0 0
        %919 = vmatpush1.bf16.msra.mxu0 0
        %920 = vmatprep.subr.bf16.mxu0 0
        %921 = vmatpush1.bf16.msra.mxu0 0
        %922 = vmatprep.mubr.bf16.mxu0 0
        %923 = vmatmul.mubr.bf16.gmra.mrb[0].mxu0 %v824
        %v924 = vpop.f32.mrb[0].mxu0
        %v925 = vadd.f32 0.0, %v924
        %v926 = vpop.f32.mrb[0].mxu0
        %v927 = vpop.f32.mrb[0].mxu0
        %v928 = vpop.f32.mrb[0].mxu0
        %929 = vdwg.mxu0
        %v930 = vadd.f32 %v814, %v925
        %s931 = scalar_lea.vmem [#allocation11], 2
        %v932 = vld [vmem:[%s931] sm:$0x1]
        %v933 = vmul.f32 %v592, %v932
        %v934 = vadd.f32 %v822, %v933
        %v936 = vlaneseq
        %v937 = vshrl.u32 %v936, 7
        %v938 = vsub.s32 0, %v937
        %v939 = vrot.slane %v934, %v938
        %v941 = vadd.f32 %v930, %v939
        %v942 = vadd.f32 %v941, %v360
        %943 = vst.msk [vmem:[%s358] sm:$0xff] %vm379, %v942
        %s944 = sand.u32 %s172, 1
        %s945 = scalar_lea.sflag [#allocation4], %s944
        %s946 = sand.u32 %s172, 1
        %s947 = smul.addr %s946, 8
        %s948 = scalar_lea.vmem [#allocation13], %s947
        // Predicated region
        $region69: #{tpu_custom_call.1} parent=43 // pred_check
          %p949 = pneg %p182
        $region70: #{tpu_custom_call.1} parent=43 // pred_check_branch
          %951 = sbr.rel (%p949) target = $region72
        $region71: #{tpu_custom_call.1} parent=43 // pred_region
          %s953 = ssub.s32 128, 128
          %954 = vsyncadd %s945, %s953
          %s955 = smul.addr %s28, 128
          %s956 = scalar_lea.hbm %s6, %s955
          %s958 = sshll.u32 %s948, 4
          %s959 = int_to_ptr.vmem [resolvable:$true] %s958
          %961 = dma.vmem_to_hbm [thread:$0]  %s959, 128, %s956, %s945
        $region72: #{tpu_custom_call.1} parent=43 // pred_fallthru
          _
      $region44: #{tpu_custom_call.1} parent=5 // pred_fallthru
        _
      %p962 = scmp.le.s32.totalorder 2, %s23
      // Predicated region
      $region73: #{tpu_custom_call.1} parent=5 // pred_check
        %p963 = pneg %p962
      $region74: #{tpu_custom_call.1} parent=5 // pred_check_branch
        %965 = sbr.rel (%p963) target = $region76
      $region75: #{tpu_custom_call.1} parent=5 // pred_region
        %s966 = ssub.s32 %s23, 2
        // Predicated region
        $region77: #{tpu_custom_call.1} parent=75 // pred_check
          %p967 = pneg %p188
        $region78: #{tpu_custom_call.1} parent=75 // pred_check_branch
          %969 = sbr.rel (%p967) target = $region80
        $region79: #{tpu_custom_call.1} parent=75 // pred_region
          %s970 = sand.u32 %s173, 1
          %s971 = scalar_lea.sflag [#allocation4], %s970
          %s972 = sand.u32 %s173, 1
          %s973 = smul.addr %s972, 8
          %s974 = scalar_lea.vmem [#allocation13], %s973
          %975 = dma.done %s971, 128
        $region80: #{tpu_custom_call.1} parent=75 // pred_fallthru
          _
      $region76: #{tpu_custom_call.1} parent=5 // pred_fallthru
        _
    $region6: #{tpu_custom_call.1} parent=1 // loop_footer
      %s27 = sadd.s32 1, %s23
    $region7: #{tpu_custom_call.1} parent=1 // loop_footer_branch
      %22 = sbr.rel target = $region3
    $region8: #{tpu_custom_call.1} parent=1 // loop_exit
      _
    %976 = vsyncpa [#allocation3], 1
    %s977 = scalar_lea.sflag [#allocation3], 1
    %978 = vsyncpa %s977, 1
    %979 = vsyncpa [#allocation6], 1
    %s980 = scalar_lea.sflag [#allocation6], 1
    %981 = vsyncpa %s980, 1
    %982 = vsyncpa [#allocation9], 1
    %983 = vsyncpa [#allocation12], 1
    %984 = vsyncpa [#allocation4], 1
    %s985 = scalar_lea.sflag [#allocation4], 1
    %986 = vsyncpa %s985, 1

</llo_original>
